<compile_context>
chip_gen: v7x
topology: tpu7x:2x2x1
jax: 0.10.0
libtpu: 0.0.40
codegen_flags: <defaults>
</compile_context>

<pallas_src>
import functools

import jax
import jax.numpy as jnp
from jax.experimental import pallas as pl
from jax.experimental.pallas import tpu as pltpu


# ----------------------------- in-kernel helpers -----------------------------

def _mm(x, w):
    """MXU matmul with f32 accumulation; lhs is cast to the (bf16) weight dtype."""
    return jnp.dot(x.astype(w.dtype), w, preferred_element_type=jnp.float32)


def _layer_norm(x, gamma, beta, eps=1e-5):
    """LayerNorm with two independent lane reductions (sum, sum-of-squares).

    var = max(E[x^2] - mu^2, 0) breaks the reduce->sub->square->reduce serial
    chain; the clamp guards the rare negative from cancellation.
    """
    inv_n = 1.0 / x.shape[-1]
    mu = jnp.sum(x, axis=-1, keepdims=True) * inv_n
    ex2 = jnp.sum(x * x, axis=-1, keepdims=True) * inv_n
    var = jnp.maximum(ex2 - mu * mu, 0.0)
    return (x - mu) * jax.lax.rsqrt(var + eps) * gamma + beta


def _onehot_mode(logits, n_cat, n_cls):
    """Argmax one-hot per categorical, assembled fully in registers.

    Called ONCE per step on the lane-stacked [prior | posterior] logits tile
    so both heads share a single pass; the caller does one lane-dense store.
    TODO(synk): replace deterministic mode with Gumbel-max sampling via
    pltpu.prng_seed/prng_random_bits if true sampling is required.
    """
    lane = jax.lax.broadcasted_iota(jnp.int32, logits.shape, 1)              # (B, n_cat*n_cls)
    cls_iota = jax.lax.broadcasted_iota(jnp.int32, (logits.shape[0], n_cls), 1)
    onehot = jnp.zeros_like(logits)
    for c in range(n_cat):                                                   # static unroll
        seg = logits[:, c * n_cls:(c + 1) * n_cls]
        m = jnp.max(seg, axis=-1, keepdims=True)
        # first index attaining the max (deterministic tie-break == argmax)
        idx = jnp.min(jnp.where(seg >= m, cls_iota, n_cls), axis=-1, keepdims=True)
        onehot = jnp.where(lane == idx + c * n_cls, 1.0, onehot)
    return onehot


# --------------------------------- the kernel --------------------------------

def rssm_repr_kernel(act_obs_ref, stoch0_ref, deter0_ref, w_ref, b_ref,
                     out_ref, stoch_c, deter_c, *, dims):
    (A, S, D, E, H, F, HD, NCAT, NCLS, L) = dims

    # Recurrent carry lives in VMEM scratch; load the caller-provided initial
    # state on the first grid step only.  (Replaces the previous
    # input_output_aliases suggestion: h never round-trips through HBM.)
    @pl.when(pl.program_id(0) == 0)
    def _():
        stoch_c[...] = stoch0_ref[...]
        deter_c[...] = deter0_ref[...]

    def w(k, r, c):            # static slice of the packed bf16 weight slab
        return w_ref[k, :r, :c]

    def b(k, c):               # static slice of the packed f32 bias slab
        return b_ref[k, :, :c]

    stoch_prev = stoch_c[...]                                            # (B, S)  f32
    h_prev = deter_c[...]                                                # (B, D)  f32

    # ---- fused first matmul: [act | obs | stoch] @ blockdiag(w_in, w1q_obs) ----
    az_obs = jnp.concatenate([act_obs_ref[...], stoch_prev], axis=-1)    # (B, A+E+S)
    x0 = _mm(az_obs, w(0, A + E + S, H + 2 * HD))                        # (B, H+2HD)
    x = jnp.maximum(x0[:, :H] + b(0, H), 0.0)        # _rnn_input_model output
    obs_post = x0[:, H:]                             # (B, 2HD): zeros | obs @ w1q[D:]

    # ---- attention stack over a length-1 sequence ----
    # softmax over a single key is identically 1, so each MHA layer reduces to
    # x @ (Wv Wo); Wq/Wk cancel from the forward value and are never DMA'd.
    for l in range(L):
        attn = _mm(x, w(1 + 3 * l, H, H))
        x = _layer_norm(attn + x, b(1 + 6 * l, H), b(2 + 6 * l, H))
        ff = jnp.maximum(_mm(x, w(2 + 3 * l, H, F)) + b(3 + 6 * l, F), 0.0)
        ff = _mm(ff, w(3 + 3 * l, F, H)) + b(4 + 6 * l, H)
        x = _layer_norm(ff + x, b(5 + 6 * l, H), b(6 + 6 * l, H))

    # ---- GRU cell: ONE matmul over [x | h], gate columns [r | z | n_in | n_h] ----
    # NOTE: at production dims keep D a multiple of 128 so the gate slices stay
    # lane-aligned; at D=32 the cross-lane selects are negligible.
    g = _mm(jnp.concatenate([x, h_prev], axis=-1), w(1 + 3 * L, H + D, 4 * D))
    g = g + b(1 + 6 * L, 4 * D)
    r = jax.nn.sigmoid(g[:, 0 * D:1 * D])
    z = jax.nn.sigmoid(g[:, 1 * D:2 * D])
    n = jnp.tanh(g[:, 2 * D:3 * D] + r * g[:, 3 * D:4 * D])
    h_new = (1.0 - z) * n + z * h_prev                                   # (B, D)

    # ---- prior & posterior DiscreteLatentDist (both heads fused) ----
    hid = _mm(h_new, w(2 + 3 * L, D, 2 * HD))                            # (B, 2HD)
    ph = jnp.maximum(hid + obs_post + b(2 + 6 * L, 2 * HD), 0.0)         # [prior_h | post_h]
    lg = _mm(ph, w(3 + 3 * L, 2 * HD, 2 * S)) + b(3 + 6 * L, 2 * S)      # [prior_lg | post_lg]
    oh = _onehot_mode(lg, 2 * NCAT, NCLS)                                # [prior_z  | post_z]

    # carry for step t+1 (posterior stoch + new deter feed the next step)
    stoch_c[...] = oh[:, S:]
    deter_c[...] = h_new

    # single lane-dense output store: [deter | prior_lg | post_lg | prior_z | post_z]
    out_ref[...] = jnp.concatenate([h_new, lg, oh], axis=-1)


# ----------------------------- parameter packing -----------------------------

def _pack_slab(mats, dtype):
    """Stack 2-D blocks into one (N, Rmax, Cpad) slab (zero padded)."""
    rows = max(m.shape[0] for m in mats)
    cols = max(m.shape[1] for m in mats)
    cols = ((cols + 127) // 128) * 128           # lane-align the slab
    slab = jnp.zeros((len(mats), rows, cols), dtype)
    for i, m in enumerate(mats):
        slab = slab.at[i, :m.shape[0], :m.shape[1]].set(m.astype(dtype))
    return slab


def pack_params(params, dims):
    """Fold the raw module parameters and pack them into two DMA slabs."""
    (A, S, D, E, H, F, HD, NCAT, NCLS, L) = dims
    (w_in, b_in, wq, wk, wv, wo, ln1g, ln1b, wff1, bff1, wff2, bff2, ln2g, ln2b,
     w_ih, w_hh, b_ih, b_hh, w1p, b1p, w2p, b2p, w1q, b1q, w2q, b2q) = params
    del wq, wk  # seq_len == 1: Wq/Wk cancel out of the forward value
    f32 = jnp.float32

    # [act | obs | stoch] -> [rnn_input (H) | obs contribution (2HD, prior half 0)]
    w0 = jnp.zeros((A + E + S, H + 2 * HD), f32)
    w0 = w0.at[:A, :H].set(w_in[:A])
    w0 = w0.at[A + E:, :H].set(w_in[A:])
    # reference posterior input is cat([deter, obs_embed]): rows D: of w1q = obs part
    w0 = w0.at[A:A + E, H + HD:].set(w1q[D:])

    wvo = jnp.einsum("lij,ljk->lik", wv, wo)     # fold V and O per attention layer

    # GRU as one matmul over [x | h]; gate columns [r | z | n_in | n_h]
    wg = jnp.zeros((H + D, 4 * D), f32)
    wg = wg.at[:H, :2 * D].set(w_ih[:, :2 * D])
    wg = wg.at[H:, :2 * D].set(w_hh[:, :2 * D])
    wg = wg.at[:H, 2 * D:3 * D].set(w_ih[:, 2 * D:])
    wg = wg.at[H:, 3 * D:].set(w_hh[:, 2 * D:])
    bg = jnp.concatenate([b_ih[:, :2 * D] + b_hh[:, :2 * D],
                          b_ih[:, 2 * D:], b_hh[:, 2 * D:]], axis=-1)

    # deter -> [prior hidden | posterior hidden (deter part)]
    w1d = jnp.concatenate([w1p, w1q[:D]], axis=1)                        # (D, 2HD)
    b1pq = jnp.concatenate([b1p, b1q], axis=-1)                          # (1, 2HD)
    # [prior_h | post_h] -> [prior logits | post logits] (block-diagonal)
    w2 = jnp.zeros((2 * HD, 2 * S), f32)
    w2 = w2.at[:HD, :S].set(w2p)
    w2 = w2.at[HD:, S:].set(w2q)
    b2 = jnp.concatenate([b2p, b2q], axis=-1)                            # (1, 2S)

    wmats = [w0]
    for l in range(L):
        wmats += [wvo[l], wff1[l], wff2[l]]
    wmats += [wg, w1d, w2]

    bvecs = [b_in]
    for l in range(L):
        bvecs += [ln1g[l], ln1b[l], bff1[l], bff2[l], ln2g[l], ln2b[l]]
    bvecs += [bg, b1pq, b2]

    wslab = _pack_slab(wmats, jnp.bfloat16)                              # (NW, R, 128)
    bslab = _pack_slab([v.reshape(1, -1) for v in bvecs], jnp.float32)   # (NB, 1, 128)
    return wslab, bslab


# --------------------------------- wrappers -----------------------------------

def rssm_rollout(obs_embed, actions, init_stoch, init_deter, packed, dims):
    """Run T recurrent representation steps inside one pallas_call.

    obs_embed: (T, B, E), actions: (T, B, A); init_stoch (B, S), init_deter (B, D).
    Returns (prior_logits, prior_stoch, deter, post_logits, post_stoch), each (T, B, .).
    """
    (A, S, D, E, H, F, HD, NCAT, NCLS, L) = dims
    wslab, bslab = packed
    T, B, _ = actions.shape
    act_obs = jnp.concatenate([actions, obs_embed], axis=-1)             # (T, B, A+E)
    out_w = D + 4 * S

    out = pl.pallas_call(
        functools.partial(rssm_repr_kernel, dims=dims),
        out_shape=jax.ShapeDtypeStruct((T, B, out_w), jnp.float32),
        grid_spec=pltpu.PrefetchScalarGridSpec(
            num_scalar_prefetch=0,
            grid=(T,),
            in_specs=[
                pl.BlockSpec((None, B, A + E), lambda t: (t, 0, 0)),     # per-step data
                pl.BlockSpec((B, S), lambda t: (0, 0)),                  # init stoch
                pl.BlockSpec((B, D), lambda t: (0, 0)),                  # init deter
                pl.BlockSpec(wslab.shape, lambda t: (0, 0, 0)),          # weights (resident)
                pl.BlockSpec(bslab.shape, lambda t: (0, 0, 0)),          # biases  (resident)
            ],
            out_specs=pl.BlockSpec((None, B, out_w), lambda t: (t, 0, 0)),
            scratch_shapes=[
                pltpu.VMEM((B, S), jnp.float32),   # stoch carry
                pltpu.VMEM((B, D), jnp.float32),   # deter carry
            ],
        ),
        # Time is a true recurrence -> sequential grid axis.
        # TODO(synk): for non-toy batch on v7x add a leading "parallel" batch
        # grid axis (or core_map over the 2 TCs); no benefit on v5e/v6e.
        compiler_params=pltpu.CompilerParams(dimension_semantics=("arbitrary",)),
    )(act_obs, init_stoch, init_deter, wslab, bslab)

    deter = out[..., :D]
    prior_logits = out[..., D:D + S]
    post_logits = out[..., D + S:D + 2 * S]
    prior_stoch = out[..., D + 2 * S:D + 3 * S]
    post_stoch = out[..., D + 3 * S:]
    return prior_logits, prior_stoch, deter, post_logits, post_stoch


def rssm_representation(obs_embed, prev_actions, prev_stoch, prev_deter, packed, dims):
    """Single-step module forward (the T == 1 slice of the rollout)."""
    outs = rssm_rollout(obs_embed[None], prev_actions[None],
                        prev_stoch, prev_deter, packed, dims)
    return tuple(o[0] for o in outs)


# ----------------------------- reference & params -----------------------------

def _argmax_onehot(logits, n_cat, n_cls):
    lg = logits.reshape(logits.shape[0], n_cat, n_cls)
    oh = jax.nn.one_hot(jnp.argmax(lg, -1), n_cls, dtype=logits.dtype)
    return oh.reshape(logits.shape[0], n_cat * n_cls)


def rssm_repr_reference(obs_embed, prev_actions, prev_stoch, prev_deter, params, dims):
    """Pure-JAX f32 reference of the module forward (argmax one-hot mode)."""
    (A, S, D, E, H, F, HD, NCAT, NCLS, L) = dims
    (w_in, b_in, wq, wk, wv, wo, ln1g, ln1b, wff1, bff1, wff2, bff2, ln2g, ln2b,
     w_ih, w_hh, b_ih, b_hh, w1p, b1p, w2p, b2p, w1q, b1q, w2q, b2q) = params
    del wq, wk  # softmax over a length-1 sequence is identically 1

    def ln(x, g, b):
        mu = jnp.mean(x, -1, keepdims=True)
        var = jnp.mean((x - mu) ** 2, -1, keepdims=True)
        return (x - mu) * jax.lax.rsqrt(var + 1e-5) * g + b

    x = jax.nn.relu(jnp.concatenate([prev_actions, prev_stoch], -1) @ w_in + b_in)
    for l in range(L):
        attn = (x @ wv[l]) @ wo[l]
        x = ln(attn + x, ln1g[l], ln1b[l])
        ff = jax.nn.relu(x @ wff1[l] + bff1[l]) @ wff2[l] + bff2[l]
        x = ln(ff + x, ln2g[l], ln2b[l])
    gi = x @ w_ih + b_ih
    gh = prev_deter @ w_hh + b_hh
    r = jax.nn.sigmoid(gi[:, :D] + gh[:, :D])
    z = jax.nn.sigmoid(gi[:, D:2 * D] + gh[:, D:2 * D])
    n = jnp.tanh(gi[:, 2 * D:] + r * gh[:, 2 * D:])
    h = (1.0 - z) * n + z * prev_deter

    def latent(inp, w1, b1, w2, b2):
        hh = jax.nn.relu(inp @ w1 + b1)
        logits = hh @ w2 + b2
        return logits, _argmax_onehot(logits, NCAT, NCLS)

    prior_logits, prior_stoch = latent(h, w1p, b1p, w2p, b2p)
    post_logits, post_stoch = latent(jnp.concatenate([h, obs_embed], -1),
                                     w1q, b1q, w2q, b2q)
    return prior_logits, prior_stoch, h, post_logits, post_stoch


def make_params(key, dims):
    (A, S, D, E, H, F, HD, NCAT, NCLS, L) = dims

    def nrm(k, shape, scale=0.1):
        return (scale * jax.random.normal(k, shape)).astype(jnp.float32)

    keys = iter(jax.random.split(key, 64))
    return [
        nrm(next(keys), (A + S, H)),        # w_in
        nrm(next(keys), (1, H)),            # b_in
        nrm(next(keys), (L, H, H)),         # wq (module parameter; cancels for seq_len=1)
        nrm(next(keys), (L, H, H)),         # wk (module parameter; cancels for seq_len=1)
        nrm(next(keys), (L, H, H)),         # wv
        nrm(next(keys), (L, H, H)),         # wo
        jnp.ones((L, 1, H), jnp.float32),   # ln1 gamma
        jnp.zeros((L, 1, H), jnp.float32),  # ln1 beta
        nrm(next(keys), (L, H, F)),         # ffn w1
        nrm(next(keys), (L, 1, F)),         # ffn b1
        nrm(next(keys), (L, F, H)),         # ffn w2
        nrm(next(keys), (L, 1, H)),         # ffn b2
        jnp.ones((L, 1, H), jnp.float32),   # ln2 gamma
        jnp.zeros((L, 1, H), jnp.float32),  # ln2 beta
        nrm(next(keys), (H, 3 * D)),        # GRU W_ih^T (gate order r, z, n)
        nrm(next(keys), (D, 3 * D)),        # GRU W_hh^T
        nrm(next(keys), (1, 3 * D)),        # GRU b_ih
        nrm(next(keys), (1, 3 * D)),        # GRU b_hh
        nrm(next(keys), (D, HD)),           # prior  w1
        nrm(next(keys), (1, HD)),           # prior  b1
        nrm(next(keys), (HD, S)),           # prior  w2
        nrm(next(keys), (1, S)),            # prior  b2
        nrm(next(keys), (D + E, HD)),       # posterior w1 (rows = [deter | obs])
        nrm(next(keys), (1, HD)),           # posterior b1
        nrm(next(keys), (HD, S)),           # posterior w2
        nrm(next(keys), (1, S)),            # posterior b2
    ]


if __name__ == "__main__":
    # args: n_categoricals=4, n_classes=8 -> stochastic_size=32,
    # deterministic_size=32, hidden_size=32, embed_size=32, attention_layers=2,
    # action_size=8, batch=2, rollout length T=4.
    B, A = 2, 8
    NCAT, NCLS = 4, 8
    S = NCAT * NCLS
    D, E, H, F, HD, L = 32, 32, 32, 32, 32, 2
    dims = (A, S, D, E, H, F, HD, NCAT, NCLS, L)
    T = 4

    key = jax.random.PRNGKey(0)
    k_obs, k_act, k_stoch, k_deter, k_par = jax.random.split(key, 5)
    obs_embed = jax.random.normal(k_obs, (T, B, E), jnp.float32)
    actions = jax.random.normal(k_act, (T, B, A), jnp.float32)
    prev_stoch = jax.random.normal(k_stoch, (B, S), jnp.float32)
    prev_deter = jax.random.normal(k_deter, (B, D), jnp.float32)
    params = make_params(k_par, dims)
    packed = pack_params(params, dims)

    # ---- single step (module forward semantics, T == 1) ----
    outs = jax.block_until_ready(
        rssm_representation(obs_embed[0], actions[0], prev_stoch, prev_deter,
                            packed, dims))
    prior_logits, prior_stoch, deter, post_logits, post_stoch = outs

    r_pl, r_ps, r_d, r_ql, r_qs = rssm_repr_reference(
        obs_embed[0], actions[0], prev_stoch, prev_deter, params, dims)
    assert bool(jnp.allclose(deter, r_d, atol=5e-2, rtol=5e-2))
    assert bool(jnp.allclose(prior_logits, r_pl, atol=5e-2, rtol=5e-2))
    assert bool(jnp.allclose(post_logits, r_ql, atol=5e-2, rtol=5e-2))
    # one-hots must be the argmax one-hot of the kernel's own logits
    assert bool(jnp.allclose(prior_stoch, _argmax_onehot(prior_logits, NCAT, NCLS), atol=1e-6))
    assert bool(jnp.allclose(post_stoch, _argmax_onehot(post_logits, NCAT, NCLS), atol=1e-6))
    assert bool(jnp.allclose(jnp.sum(prior_stoch, -1), NCAT))
    assert bool(jnp.allclose(jnp.sum(post_stoch, -1), NCAT))

    # ---- T-step rollout: weights DMA'd once, recurrent state carried in VMEM ----
    roll = jax.block_until_ready(
        rssm_rollout(obs_embed, actions, prev_stoch, prev_deter, packed, dims))
    rp_l, rp_s, rdet, rq_l, rq_s = roll
    assert rdet.shape == (T, B, D) and rq_s.shape == (T, B, S)
    # step 0 of the rollout must reproduce the single-step call
    assert bool(jnp.allclose(rdet[0], deter, atol=1e-4, rtol=1e-4))
    assert bool(jnp.allclose(rq_l[0], post_logits, atol=1e-4, rtol=1e-4))
    assert bool(jnp.all(jnp.isfinite(rdet))) and bool(jnp.all(jnp.isfinite(rp_l)))
    assert bool(jnp.allclose(jnp.sum(rp_s, -1), NCAT))
    assert bool(jnp.allclose(jnp.sum(rq_s, -1), NCAT))

    print("KERNEL_OK")
</pallas_src>

<mosaic_0001>
module attributes {stable_mosaic.version = 11 : i64} {
  func.func @rssm_repr_kernel(%arg0: i32, %arg1: memref<1x2x40xf32, #tpu.memory_space<vmem>>, %arg2: memref<2x32xf32, #tpu.memory_space<vmem>>, %arg3: memref<2x32xf32, #tpu.memory_space<vmem>>, %arg4: memref<10x72x128xbf16, #tpu.memory_space<vmem>>, %arg5: memref<16x1x128xf32, #tpu.memory_space<vmem>>, %arg6: memref<1x2x160xf32, #tpu.memory_space<vmem>>, %arg7: memref<2x32xf32, #tpu.memory_space<vmem>>, %arg8: memref<2x32xf32, #tpu.memory_space<vmem>>) attributes {dimension_semantics = [#tpu.dimension_semantics<arbitrary>], iteration_bounds = array<i64: 1>, scalar_prefetch = 0 : i64, scratch_operands = 2 : i64, tpu.core_type = #tpu.core_type<tc>, window_params = [{transform_indices = @transform_0, window_bounds = array<i64: 1, 2, 40>}, {pipeline_mode = #tpu.pipeline_mode<synchronous>, transform_indices = @transform_1, window_bounds = array<i64: 2, 32>}, {pipeline_mode = #tpu.pipeline_mode<synchronous>, transform_indices = @transform_2, window_bounds = array<i64: 2, 32>}, {pipeline_mode = #tpu.pipeline_mode<synchronous>, transform_indices = @transform_3, window_bounds = array<i64: 10, 72, 128>}, {pipeline_mode = #tpu.pipeline_mode<synchronous>, transform_indices = @transform_4, window_bounds = array<i64: 16, 1, 128>}, {transform_indices = @transform_5, window_bounds = array<i64: 1, 2, 160>}]} {
    %c0_i32 = arith.constant 0 : i32
    %0 = arith.cmpi eq, %arg0, %c0_i32 : i32
    %1 = arith.extui %0 : i1 to i32
    %c0_i32_0 = arith.constant 0 : i32
    %2 = arith.cmpi ne, %1, %c0_i32_0 : i32
    scf.if %2 {
      %c0_151 = arith.constant 0 : index
      %c0_152 = arith.constant 0 : index
      %360 = vector.load %arg2[%c0_151, %c0_152] : memref<2x32xf32, #tpu.memory_space<vmem>>, vector<2x32xf32>
      %c0_153 = arith.constant 0 : index
      %c0_154 = arith.constant 0 : index
      %361 = vector.load %arg7[%c0_153, %c0_154] : memref<2x32xf32, #tpu.memory_space<vmem>>, vector<2x32xf32>
      tpu.vector_store %arg7[%c0_153, %c0_154], %360 {strides = array<i32>} : memref<2x32xf32, #tpu.memory_space<vmem>>, vector<2x32xf32>,
      %c0_155 = arith.constant 0 : index
      %c0_156 = arith.constant 0 : index
      %362 = vector.load %arg3[%c0_155, %c0_156] : memref<2x32xf32, #tpu.memory_space<vmem>>, vector<2x32xf32>
      %c0_157 = arith.constant 0 : index
      %c0_158 = arith.constant 0 : index
      %363 = vector.load %arg8[%c0_157, %c0_158] : memref<2x32xf32, #tpu.memory_space<vmem>>, vector<2x32xf32>
      tpu.vector_store %arg8[%c0_157, %c0_158], %362 {strides = array<i32>} : memref<2x32xf32, #tpu.memory_space<vmem>>, vector<2x32xf32>,
    } else {
    }
    %c0 = arith.constant 0 : index
    %c0_1 = arith.constant 0 : index
    %3 = vector.load %arg7[%c0, %c0_1] : memref<2x32xf32, #tpu.memory_space<vmem>>, vector<2x32xf32>
    %c0_2 = arith.constant 0 : index
    %c0_3 = arith.constant 0 : index
    %4 = vector.load %arg8[%c0_2, %c0_3] : memref<2x32xf32, #tpu.memory_space<vmem>>, vector<2x32xf32>
    %c0_4 = arith.constant 0 : index
    %c0_5 = arith.constant 0 : index
    %c0_6 = arith.constant 0 : index
    %5 = vector.load %arg1[%c0_4, %c0_5, %c0_6] : memref<1x2x40xf32, #tpu.memory_space<vmem>>, vector<1x2x40xf32>
    %6 = vector.shape_cast %5 : vector<1x2x40xf32> to vector<2x40xf32>
    %7 = tpu.concatenate %6, %3 in 1 : vector<2x40xf32>, vector<2x32xf32> -> vector<2x72xf32>
    %c0_7 = arith.constant 0 : index
    %c0_8 = arith.constant 0 : index
    %c0_9 = arith.constant 0 : index
    %8 = vector.load %arg4[%c0_7, %c0_8, %c0_9] : memref<10x72x128xbf16, #tpu.memory_space<vmem>>, vector<1x72x96xbf16>
    %9 = vector.shape_cast %8 : vector<1x72x96xbf16> to vector<72x96xbf16>
    %10 = arith.truncf %7 : vector<2x72xf32> to vector<2x72xbf16>
    %cst = arith.constant dense<0.000000e+00> : vector<2x96xf32>
    %11 = tpu.matmul %10, %9, %cst {dimension_numbers = #tpu.dot_dimension_numbers<[1], [0], [0], [1], [0, 0, 1, 1], [], []>} : vector<2x72xbf16>, vector<72x96xbf16>, vector<2x96xf32> -> vector<2x96xf32>
    %12 = vector.extract_strided_slice %11 {offsets = [0, 0], sizes = [2, 32], strides = [1, 1]} : vector<2x96xf32> to vector<2x32xf32>
    %c0_10 = arith.constant 0 : index
    %c0_11 = arith.constant 0 : index
    %c0_12 = arith.constant 0 : index
    %13 = vector.load %arg5[%c0_10, %c0_11, %c0_12] : memref<16x1x128xf32, #tpu.memory_space<vmem>>, vector<1x1x32xf32>
    %14 = vector.shape_cast %13 : vector<1x1x32xf32> to vector<1x32xf32>
    %15 = vector.broadcast %14 : vector<1x32xf32> to vector<2x32xf32>
    %16 = arith.addf %12, %15 : vector<2x32xf32>
    %cst_13 = arith.constant 0.000000e+00 : f32
    %17 = vector.broadcast %cst_13 : f32 to vector<2x32xf32>
    %18 = arith.maximumf %16, %17 : vector<2x32xf32>
    %19 = vector.extract_strided_slice %11 {offsets = [0, 32], sizes = [2, 64], strides = [1, 1]} : vector<2x96xf32> to vector<2x64xf32>
    %c1 = arith.constant 1 : index
    %c0_14 = arith.constant 0 : index
    %c0_15 = arith.constant 0 : index
    %20 = vector.load %arg4[%c1, %c0_14, %c0_15] : memref<10x72x128xbf16, #tpu.memory_space<vmem>>, vector<1x32x32xbf16>
    %21 = vector.shape_cast %20 : vector<1x32x32xbf16> to vector<32x32xbf16>
    %22 = arith.truncf %18 : vector<2x32xf32> to vector<2x32xbf16>
    %cst_16 = arith.constant dense<0.000000e+00> : vector<2x32xf32>
    %23 = tpu.matmul %22, %21, %cst_16 {dimension_numbers = #tpu.dot_dimension_numbers<[1], [0], [0], [1], [0, 0, 1, 1], [], []>} : vector<2x32xbf16>, vector<32x32xbf16>, vector<2x32xf32> -> vector<2x32xf32>
    %24 = arith.addf %23, %18 : vector<2x32xf32>
    %c1_17 = arith.constant 1 : index
    %c0_18 = arith.constant 0 : index
    %c0_19 = arith.constant 0 : index
    %25 = vector.load %arg5[%c1_17, %c0_18, %c0_19] : memref<16x1x128xf32, #tpu.memory_space<vmem>>, vector<1x1x32xf32>
    %26 = vector.shape_cast %25 : vector<1x1x32xf32> to vector<1x32xf32>
    %c2 = arith.constant 2 : index
    %c0_20 = arith.constant 0 : index
    %c0_21 = arith.constant 0 : index
    %27 = vector.load %arg5[%c2, %c0_20, %c0_21] : memref<16x1x128xf32, #tpu.memory_space<vmem>>, vector<1x1x32xf32>
    %28 = vector.shape_cast %27 : vector<1x1x32xf32> to vector<1x32xf32>
    %cst_22 = arith.constant dense<0.000000e+00> : vector<2xf32>
    %29 = vector.multi_reduction <add>, %24, %cst_22 [1] : vector<2x32xf32> to vector<2xf32>
    %30 = vector.shape_cast %29 : vector<2xf32> to vector<2x1xf32>
    %cst_23 = arith.constant 3.125000e-02 : f32
    %31 = vector.broadcast %cst_23 : f32 to vector<2x1xf32>
    %32 = arith.mulf %30, %31 : vector<2x1xf32>
    %33 = arith.mulf %24, %24 : vector<2x32xf32>
    %cst_24 = arith.constant dense<0.000000e+00> : vector<2xf32>
    %34 = vector.multi_reduction <add>, %33, %cst_24 [1] : vector<2x32xf32> to vector<2xf32>
    %35 = vector.shape_cast %34 : vector<2xf32> to vector<2x1xf32>
    %cst_25 = arith.constant 3.125000e-02 : f32
    %36 = vector.broadcast %cst_25 : f32 to vector<2x1xf32>
    %37 = arith.mulf %35, %36 : vector<2x1xf32>
    %38 = arith.mulf %32, %32 : vector<2x1xf32>
    %39 = arith.subf %37, %38 : vector<2x1xf32>
    %cst_26 = arith.constant 0.000000e+00 : f32
    %40 = vector.broadcast %cst_26 : f32 to vector<2x1xf32>
    %41 = arith.maximumf %39, %40 : vector<2x1xf32>
    %42 = vector.broadcast %32 : vector<2x1xf32> to vector<2x32xf32>
    %43 = arith.subf %24, %42 : vector<2x32xf32>
    %cst_27 = arith.constant 9.99999974E-6 : f32
    %44 = vector.broadcast %cst_27 : f32 to vector<2x1xf32>
    %45 = arith.addf %41, %44 : vector<2x1xf32>
    %46 = math.rsqrt %45 : vector<2x1xf32>
    %47 = vector.broadcast %46 : vector<2x1xf32> to vector<2x32xf32>
    %48 = arith.mulf %43, %47 : vector<2x32xf32>
    %49 = vector.broadcast %26 : vector<1x32xf32> to vector<2x32xf32>
    %50 = arith.mulf %48, %49 : vector<2x32xf32>
    %51 = vector.broadcast %28 : vector<1x32xf32> to vector<2x32xf32>
    %52 = arith.addf %50, %51 : vector<2x32xf32>
    %c2_28 = arith.constant 2 : index
    %c0_29 = arith.constant 0 : index
    %c0_30 = arith.constant 0 : index
    %53 = vector.load %arg4[%c2_28, %c0_29, %c0_30] : memref<10x72x128xbf16, #tpu.memory_space<vmem>>, vector<1x32x32xbf16>
    %54 = vector.shape_cast %53 : vector<1x32x32xbf16> to vector<32x32xbf16>
    %55 = arith.truncf %52 : vector<2x32xf32> to vector<2x32xbf16>
    %cst_31 = arith.constant dense<0.000000e+00> : vector<2x32xf32>
    %56 = tpu.matmul %55, %54, %cst_31 {dimension_numbers = #tpu.dot_dimension_numbers<[1], [0], [0], [1], [0, 0, 1, 1], [], []>} : vector<2x32xbf16>, vector<32x32xbf16>, vector<2x32xf32> -> vector<2x32xf32>
    %c3 = arith.constant 3 : index
    %c0_32 = arith.constant 0 : index
    %c0_33 = arith.constant 0 : index
    %57 = vector.load %arg5[%c3, %c0_32, %c0_33] : memref<16x1x128xf32, #tpu.memory_space<vmem>>, vector<1x1x32xf32>
    %58 = vector.shape_cast %57 : vector<1x1x32xf32> to vector<1x32xf32>
    %59 = vector.broadcast %58 : vector<1x32xf32> to vector<2x32xf32>
    %60 = arith.addf %56, %59 : vector<2x32xf32>
    %cst_34 = arith.constant 0.000000e+00 : f32
    %61 = vector.broadcast %cst_34 : f32 to vector<2x32xf32>
    %62 = arith.maximumf %60, %61 : vector<2x32xf32>
    %c3_35 = arith.constant 3 : index
    %c0_36 = arith.constant 0 : index
    %c0_37 = arith.constant 0 : index
    %63 = vector.load %arg4[%c3_35, %c0_36, %c0_37] : memref<10x72x128xbf16, #tpu.memory_space<vmem>>, vector<1x32x32xbf16>
    %64 = vector.shape_cast %63 : vector<1x32x32xbf16> to vector<32x32xbf16>
    %65 = arith.truncf %62 : vector<2x32xf32> to vector<2x32xbf16>
    %cst_38 = arith.constant dense<0.000000e+00> : vector<2x32xf32>
    %66 = tpu.matmul %65, %64, %cst_38 {dimension_numbers = #tpu.dot_dimension_numbers<[1], [0], [0], [1], [0, 0, 1, 1], [], []>} : vector<2x32xbf16>, vector<32x32xbf16>, vector<2x32xf32> -> vector<2x32xf32>
    %c4 = arith.constant 4 : index
    %c0_39 = arith.constant 0 : index
    %c0_40 = arith.constant 0 : index
    %67 = vector.load %arg5[%c4, %c0_39, %c0_40] : memref<16x1x128xf32, #tpu.memory_space<vmem>>, vector<1x1x32xf32>
    %68 = vector.shape_cast %67 : vector<1x1x32xf32> to vector<1x32xf32>
    %69 = vector.broadcast %68 : vector<1x32xf32> to vector<2x32xf32>
    %70 = arith.addf %66, %69 : vector<2x32xf32>
    %71 = arith.addf %70, %52 : vector<2x32xf32>
    %c5 = arith.constant 5 : index
    %c0_41 = arith.constant 0 : index
    %c0_42 = arith.constant 0 : index
    %72 = vector.load %arg5[%c5, %c0_41, %c0_42] : memref<16x1x128xf32, #tpu.memory_space<vmem>>, vector<1x1x32xf32>
    %73 = vector.shape_cast %72 : vector<1x1x32xf32> to vector<1x32xf32>
    %c6 = arith.constant 6 : index
    %c0_43 = arith.constant 0 : index
    %c0_44 = arith.constant 0 : index
    %74 = vector.load %arg5[%c6, %c0_43, %c0_44] : memref<16x1x128xf32, #tpu.memory_space<vmem>>, vector<1x1x32xf32>
    %75 = vector.shape_cast %74 : vector<1x1x32xf32> to vector<1x32xf32>
    %cst_45 = arith.constant dense<0.000000e+00> : vector<2xf32>
    %76 = vector.multi_reduction <add>, %71, %cst_45 [1] : vector<2x32xf32> to vector<2xf32>
    %77 = vector.shape_cast %76 : vector<2xf32> to vector<2x1xf32>
    %cst_46 = arith.constant 3.125000e-02 : f32
    %78 = vector.broadcast %cst_46 : f32 to vector<2x1xf32>
    %79 = arith.mulf %77, %78 : vector<2x1xf32>
    %80 = arith.mulf %71, %71 : vector<2x32xf32>
    %cst_47 = arith.constant dense<0.000000e+00> : vector<2xf32>
    %81 = vector.multi_reduction <add>, %80, %cst_47 [1] : vector<2x32xf32> to vector<2xf32>
    %82 = vector.shape_cast %81 : vector<2xf32> to vector<2x1xf32>
    %cst_48 = arith.constant 3.125000e-02 : f32
    %83 = vector.broadcast %cst_48 : f32 to vector<2x1xf32>
    %84 = arith.mulf %82, %83 : vector<2x1xf32>
    %85 = arith.mulf %79, %79 : vector<2x1xf32>
    %86 = arith.subf %84, %85 : vector<2x1xf32>
    %cst_49 = arith.constant 0.000000e+00 : f32
    %87 = vector.broadcast %cst_49 : f32 to vector<2x1xf32>
    %88 = arith.maximumf %86, %87 : vector<2x1xf32>
    %89 = vector.broadcast %79 : vector<2x1xf32> to vector<2x32xf32>
    %90 = arith.subf %71, %89 : vector<2x32xf32>
    %cst_50 = arith.constant 9.99999974E-6 : f32
    %91 = vector.broadcast %cst_50 : f32 to vector<2x1xf32>
    %92 = arith.addf %88, %91 : vector<2x1xf32>
    %93 = math.rsqrt %92 : vector<2x1xf32>
    %94 = vector.broadcast %93 : vector<2x1xf32> to vector<2x32xf32>
    %95 = arith.mulf %90, %94 : vector<2x32xf32>
    %96 = vector.broadcast %73 : vector<1x32xf32> to vector<2x32xf32>
    %97 = arith.mulf %95, %96 : vector<2x32xf32>
    %98 = vector.broadcast %75 : vector<1x32xf32> to vector<2x32xf32>
    %99 = arith.addf %97, %98 : vector<2x32xf32>
    %c4_51 = arith.constant 4 : index
    %c0_52 = arith.constant 0 : index
    %c0_53 = arith.constant 0 : index
    %100 = vector.load %arg4[%c4_51, %c0_52, %c0_53] : memref<10x72x128xbf16, #tpu.memory_space<vmem>>, vector<1x32x32xbf16>
    %101 = vector.shape_cast %100 : vector<1x32x32xbf16> to vector<32x32xbf16>
    %102 = arith.truncf %99 : vector<2x32xf32> to vector<2x32xbf16>
    %cst_54 = arith.constant dense<0.000000e+00> : vector<2x32xf32>
    %103 = tpu.matmul %102, %101, %cst_54 {dimension_numbers = #tpu.dot_dimension_numbers<[1], [0], [0], [1], [0, 0, 1, 1], [], []>} : vector<2x32xbf16>, vector<32x32xbf16>, vector<2x32xf32> -> vector<2x32xf32>
    %104 = arith.addf %103, %99 : vector<2x32xf32>
    %c7 = arith.constant 7 : index
    %c0_55 = arith.constant 0 : index
    %c0_56 = arith.constant 0 : index
    %105 = vector.load %arg5[%c7, %c0_55, %c0_56] : memref<16x1x128xf32, #tpu.memory_space<vmem>>, vector<1x1x32xf32>
    %106 = vector.shape_cast %105 : vector<1x1x32xf32> to vector<1x32xf32>
    %c8 = arith.constant 8 : index
    %c0_57 = arith.constant 0 : index
    %c0_58 = arith.constant 0 : index
    %107 = vector.load %arg5[%c8, %c0_57, %c0_58] : memref<16x1x128xf32, #tpu.memory_space<vmem>>, vector<1x1x32xf32>
    %108 = vector.shape_cast %107 : vector<1x1x32xf32> to vector<1x32xf32>
    %cst_59 = arith.constant dense<0.000000e+00> : vector<2xf32>
    %109 = vector.multi_reduction <add>, %104, %cst_59 [1] : vector<2x32xf32> to vector<2xf32>
    %110 = vector.shape_cast %109 : vector<2xf32> to vector<2x1xf32>
    %cst_60 = arith.constant 3.125000e-02 : f32
    %111 = vector.broadcast %cst_60 : f32 to vector<2x1xf32>
    %112 = arith.mulf %110, %111 : vector<2x1xf32>
    %113 = arith.mulf %104, %104 : vector<2x32xf32>
    %cst_61 = arith.constant dense<0.000000e+00> : vector<2xf32>
    %114 = vector.multi_reduction <add>, %113, %cst_61 [1] : vector<2x32xf32> to vector<2xf32>
    %115 = vector.shape_cast %114 : vector<2xf32> to vector<2x1xf32>
    %cst_62 = arith.constant 3.125000e-02 : f32
    %116 = vector.broadcast %cst_62 : f32 to vector<2x1xf32>
    %117 = arith.mulf %115, %116 : vector<2x1xf32>
    %118 = arith.mulf %112, %112 : vector<2x1xf32>
    %119 = arith.subf %117, %118 : vector<2x1xf32>
    %cst_63 = arith.constant 0.000000e+00 : f32
    %120 = vector.broadcast %cst_63 : f32 to vector<2x1xf32>
    %121 = arith.maximumf %119, %120 : vector<2x1xf32>
    %122 = vector.broadcast %112 : vector<2x1xf32> to vector<2x32xf32>
    %123 = arith.subf %104, %122 : vector<2x32xf32>
    %cst_64 = arith.constant 9.99999974E-6 : f32
    %124 = vector.broadcast %cst_64 : f32 to vector<2x1xf32>
    %125 = arith.addf %121, %124 : vector<2x1xf32>
    %126 = math.rsqrt %125 : vector<2x1xf32>
    %127 = vector.broadcast %126 : vector<2x1xf32> to vector<2x32xf32>
    %128 = arith.mulf %123, %127 : vector<2x32xf32>
    %129 = vector.broadcast %106 : vector<1x32xf32> to vector<2x32xf32>
    %130 = arith.mulf %128, %129 : vector<2x32xf32>
    %131 = vector.broadcast %108 : vector<1x32xf32> to vector<2x32xf32>
    %132 = arith.addf %130, %131 : vector<2x32xf32>
    %c5_65 = arith.constant 5 : index
    %c0_66 = arith.constant 0 : index
    %c0_67 = arith.constant 0 : index
    %133 = vector.load %arg4[%c5_65, %c0_66, %c0_67] : memref<10x72x128xbf16, #tpu.memory_space<vmem>>, vector<1x32x32xbf16>
    %134 = vector.shape_cast %133 : vector<1x32x32xbf16> to vector<32x32xbf16>
    %135 = arith.truncf %132 : vector<2x32xf32> to vector<2x32xbf16>
    %cst_68 = arith.constant dense<0.000000e+00> : vector<2x32xf32>
    %136 = tpu.matmul %135, %134, %cst_68 {dimension_numbers = #tpu.dot_dimension_numbers<[1], [0], [0], [1], [0, 0, 1, 1], [], []>} : vector<2x32xbf16>, vector<32x32xbf16>, vector<2x32xf32> -> vector<2x32xf32>
    %c9 = arith.constant 9 : index
    %c0_69 = arith.constant 0 : index
    %c0_70 = arith.constant 0 : index
    %137 = vector.load %arg5[%c9, %c0_69, %c0_70] : memref<16x1x128xf32, #tpu.memory_space<vmem>>, vector<1x1x32xf32>
    %138 = vector.shape_cast %137 : vector<1x1x32xf32> to vector<1x32xf32>
    %139 = vector.broadcast %138 : vector<1x32xf32> to vector<2x32xf32>
    %140 = arith.addf %136, %139 : vector<2x32xf32>
    %cst_71 = arith.constant 0.000000e+00 : f32
    %141 = vector.broadcast %cst_71 : f32 to vector<2x32xf32>
    %142 = arith.maximumf %140, %141 : vector<2x32xf32>
    %c6_72 = arith.constant 6 : index
    %c0_73 = arith.constant 0 : index
    %c0_74 = arith.constant 0 : index
    %143 = vector.load %arg4[%c6_72, %c0_73, %c0_74] : memref<10x72x128xbf16, #tpu.memory_space<vmem>>, vector<1x32x32xbf16>
    %144 = vector.shape_cast %143 : vector<1x32x32xbf16> to vector<32x32xbf16>
    %145 = arith.truncf %142 : vector<2x32xf32> to vector<2x32xbf16>
    %cst_75 = arith.constant dense<0.000000e+00> : vector<2x32xf32>
    %146 = tpu.matmul %145, %144, %cst_75 {dimension_numbers = #tpu.dot_dimension_numbers<[1], [0], [0], [1], [0, 0, 1, 1], [], []>} : vector<2x32xbf16>, vector<32x32xbf16>, vector<2x32xf32> -> vector<2x32xf32>
    %c10 = arith.constant 10 : index
    %c0_76 = arith.constant 0 : index
    %c0_77 = arith.constant 0 : index
    %147 = vector.load %arg5[%c10, %c0_76, %c0_77] : memref<16x1x128xf32, #tpu.memory_space<vmem>>, vector<1x1x32xf32>
    %148 = vector.shape_cast %147 : vector<1x1x32xf32> to vector<1x32xf32>
    %149 = vector.broadcast %148 : vector<1x32xf32> to vector<2x32xf32>
    %150 = arith.addf %146, %149 : vector<2x32xf32>
    %151 = arith.addf %150, %132 : vector<2x32xf32>
    %c11 = arith.constant 11 : index
    %c0_78 = arith.constant 0 : index
    %c0_79 = arith.constant 0 : index
    %152 = vector.load %arg5[%c11, %c0_78, %c0_79] : memref<16x1x128xf32, #tpu.memory_space<vmem>>, vector<1x1x32xf32>
    %153 = vector.shape_cast %152 : vector<1x1x32xf32> to vector<1x32xf32>
    %c12 = arith.constant 12 : index
    %c0_80 = arith.constant 0 : index
    %c0_81 = arith.constant 0 : index
    %154 = vector.load %arg5[%c12, %c0_80, %c0_81] : memref<16x1x128xf32, #tpu.memory_space<vmem>>, vector<1x1x32xf32>
    %155 = vector.shape_cast %154 : vector<1x1x32xf32> to vector<1x32xf32>
    %cst_82 = arith.constant dense<0.000000e+00> : vector<2xf32>
    %156 = vector.multi_reduction <add>, %151, %cst_82 [1] : vector<2x32xf32> to vector<2xf32>
    %157 = vector.shape_cast %156 : vector<2xf32> to vector<2x1xf32>
    %cst_83 = arith.constant 3.125000e-02 : f32
    %158 = vector.broadcast %cst_83 : f32 to vector<2x1xf32>
    %159 = arith.mulf %157, %158 : vector<2x1xf32>
    %160 = arith.mulf %151, %151 : vector<2x32xf32>
    %cst_84 = arith.constant dense<0.000000e+00> : vector<2xf32>
    %161 = vector.multi_reduction <add>, %160, %cst_84 [1] : vector<2x32xf32> to vector<2xf32>
    %162 = vector.shape_cast %161 : vector<2xf32> to vector<2x1xf32>
    %cst_85 = arith.constant 3.125000e-02 : f32
    %163 = vector.broadcast %cst_85 : f32 to vector<2x1xf32>
    %164 = arith.mulf %162, %163 : vector<2x1xf32>
    %165 = arith.mulf %159, %159 : vector<2x1xf32>
    %166 = arith.subf %164, %165 : vector<2x1xf32>
    %cst_86 = arith.constant 0.000000e+00 : f32
    %167 = vector.broadcast %cst_86 : f32 to vector<2x1xf32>
    %168 = arith.maximumf %166, %167 : vector<2x1xf32>
    %169 = vector.broadcast %159 : vector<2x1xf32> to vector<2x32xf32>
    %170 = arith.subf %151, %169 : vector<2x32xf32>
    %cst_87 = arith.constant 9.99999974E-6 : f32
    %171 = vector.broadcast %cst_87 : f32 to vector<2x1xf32>
    %172 = arith.addf %168, %171 : vector<2x1xf32>
    %173 = math.rsqrt %172 : vector<2x1xf32>
    %174 = vector.broadcast %173 : vector<2x1xf32> to vector<2x32xf32>
    %175 = arith.mulf %170, %174 : vector<2x32xf32>
    %176 = vector.broadcast %153 : vector<1x32xf32> to vector<2x32xf32>
    %177 = arith.mulf %175, %176 : vector<2x32xf32>
    %178 = vector.broadcast %155 : vector<1x32xf32> to vector<2x32xf32>
    %179 = arith.addf %177, %178 : vector<2x32xf32>
    %180 = tpu.concatenate %179, %4 in 1 : vector<2x32xf32>, vector<2x32xf32> -> vector<2x64xf32>
    %c7_88 = arith.constant 7 : index
    %c0_89 = arith.constant 0 : index
    %c0_90 = arith.constant 0 : index
    %181 = vector.load %arg4[%c7_88, %c0_89, %c0_90] : memref<10x72x128xbf16, #tpu.memory_space<vmem>>, vector<1x64x128xbf16>
    %182 = vector.shape_cast %181 : vector<1x64x128xbf16> to vector<64x128xbf16>
    %183 = arith.truncf %180 : vector<2x64xf32> to vector<2x64xbf16>
    %cst_91 = arith.constant dense<0.000000e+00> : vector<2x128xf32>
    %184 = tpu.matmul %183, %182, %cst_91 {dimension_numbers = #tpu.dot_dimension_numbers<[1], [0], [0], [1], [0, 0, 1, 1], [], []>} : vector<2x64xbf16>, vector<64x128xbf16>, vector<2x128xf32> -> vector<2x128xf32>
    %c13 = arith.constant 13 : index
    %c0_92 = arith.constant 0 : index
    %c0_93 = arith.constant 0 : index
    %185 = vector.load %arg5[%c13, %c0_92, %c0_93] : memref<16x1x128xf32, #tpu.memory_space<vmem>>, vector<1x1x128xf32>
    %186 = vector.shape_cast %185 : vector<1x1x128xf32> to vector<1x128xf32>
    %187 = vector.broadcast %186 : vector<1x128xf32> to vector<2x128xf32>
    %188 = arith.addf %184, %187 : vector<2x128xf32>
    %189 = vector.extract_strided_slice %188 {offsets = [0, 0], sizes = [2, 32], strides = [1, 1]} : vector<2x128xf32> to vector<2x32xf32>
    %190 = arith.negf %189 : vector<2x32xf32>
    %191 = math.exp %190 : vector<2x32xf32>
    %cst_94 = arith.constant 1.000000e+00 : f32
    %192 = vector.broadcast %cst_94 : f32 to vector<2x32xf32>
    %193 = arith.addf %192, %191 : vector<2x32xf32>
    %194 = arith.divf %192, %193 : vector<2x32xf32>
    %195 = vector.extract_strided_slice %188 {offsets = [0, 32], sizes = [2, 32], strides = [1, 1]} : vector<2x128xf32> to vector<2x32xf32>
    %196 = arith.negf %195 : vector<2x32xf32>
    %197 = math.exp %196 : vector<2x32xf32>
    %cst_95 = arith.constant 1.000000e+00 : f32
    %198 = vector.broadcast %cst_95 : f32 to vector<2x32xf32>
    %199 = arith.addf %198, %197 : vector<2x32xf32>
    %200 = arith.divf %198, %199 : vector<2x32xf32>
    %201 = vector.extract_strided_slice %188 {offsets = [0, 64], sizes = [2, 32], strides = [1, 1]} : vector<2x128xf32> to vector<2x32xf32>
    %202 = vector.extract_strided_slice %188 {offsets = [0, 96], sizes = [2, 32], strides = [1, 1]} : vector<2x128xf32> to vector<2x32xf32>
    %203 = arith.mulf %194, %202 : vector<2x32xf32>
    %204 = arith.addf %201, %203 : vector<2x32xf32>
    %205 = math.tanh %204 : vector<2x32xf32>
    %cst_96 = arith.constant 1.000000e+00 : f32
    %206 = vector.broadcast %cst_96 : f32 to vector<2x32xf32>
    %207 = arith.subf %206, %200 : vector<2x32xf32>
    %208 = arith.mulf %207, %205 : vector<2x32xf32>
    %209 = arith.mulf %200, %4 : vector<2x32xf32>
    %210 = arith.addf %208, %209 : vector<2x32xf32>
    %c8_97 = arith.constant 8 : index
    %c0_98 = arith.constant 0 : index
    %c0_99 = arith.constant 0 : index
    %211 = vector.load %arg4[%c8_97, %c0_98, %c0_99] : memref<10x72x128xbf16, #tpu.memory_space<vmem>>, vector<1x32x64xbf16>
    %212 = vector.shape_cast %211 : vector<1x32x64xbf16> to vector<32x64xbf16>
    %213 = arith.truncf %210 : vector<2x32xf32> to vector<2x32xbf16>
    %cst_100 = arith.constant dense<0.000000e+00> : vector<2x64xf32>
    %214 = tpu.matmul %213, %212, %cst_100 {dimension_numbers = #tpu.dot_dimension_numbers<[1], [0], [0], [1], [0, 0, 1, 1], [], []>} : vector<2x32xbf16>, vector<32x64xbf16>, vector<2x64xf32> -> vector<2x64xf32>
    %215 = arith.addf %214, %19 : vector<2x64xf32>
    %c14 = arith.constant 14 : index
    %c0_101 = arith.constant 0 : index
    %c0_102 = arith.constant 0 : index
    %216 = vector.load %arg5[%c14, %c0_101, %c0_102] : memref<16x1x128xf32, #tpu.memory_space<vmem>>, vector<1x1x64xf32>
    %217 = vector.shape_cast %216 : vector<1x1x64xf32> to vector<1x64xf32>
    %218 = vector.broadcast %217 : vector<1x64xf32> to vector<2x64xf32>
    %219 = arith.addf %215, %218 : vector<2x64xf32>
    %cst_103 = arith.constant 0.000000e+00 : f32
    %220 = vector.broadcast %cst_103 : f32 to vector<2x64xf32>
    %221 = arith.maximumf %219, %220 : vector<2x64xf32>
    %c9_104 = arith.constant 9 : index
    %c0_105 = arith.constant 0 : index
    %c0_106 = arith.constant 0 : index
    %222 = vector.load %arg4[%c9_104, %c0_105, %c0_106] : memref<10x72x128xbf16, #tpu.memory_space<vmem>>, vector<1x64x64xbf16>
    %223 = vector.shape_cast %222 : vector<1x64x64xbf16> to vector<64x64xbf16>
    %224 = arith.truncf %221 : vector<2x64xf32> to vector<2x64xbf16>
    %cst_107 = arith.constant dense<0.000000e+00> : vector<2x64xf32>
    %225 = tpu.matmul %224, %223, %cst_107 {dimension_numbers = #tpu.dot_dimension_numbers<[1], [0], [0], [1], [0, 0, 1, 1], [], []>} : vector<2x64xbf16>, vector<64x64xbf16>, vector<2x64xf32> -> vector<2x64xf32>
    %c15 = arith.constant 15 : index
    %c0_108 = arith.constant 0 : index
    %c0_109 = arith.constant 0 : index
    %226 = vector.load %arg5[%c15, %c0_108, %c0_109] : memref<16x1x128xf32, #tpu.memory_space<vmem>>, vector<1x1x64xf32>
    %227 = vector.shape_cast %226 : vector<1x1x64xf32> to vector<1x64xf32>
    %228 = vector.broadcast %227 : vector<1x64xf32> to vector<2x64xf32>
    %229 = arith.addf %225, %228 : vector<2x64xf32>
    %230 = tpu.iota {dimensions = array<i32: 1>} : vector<2x64xi32>
    %231 = tpu.iota {dimensions = array<i32: 1>} : vector<2x8xi32>
    %cst_110 = arith.constant 0.000000e+00 : f32
    %232 = vector.broadcast %cst_110 : f32 to vector<2x64xf32>
    %233 = vector.extract_strided_slice %229 {offsets = [0, 0], sizes = [2, 8], strides = [1, 1]} : vector<2x64xf32> to vector<2x8xf32>
    %cst_111 = arith.constant dense<0xFF800000> : vector<2xf32>
    %234 = vector.multi_reduction <maximumf>, %233, %cst_111 [1] : vector<2x8xf32> to vector<2xf32>
    %235 = vector.shape_cast %234 : vector<2xf32> to vector<2x1xf32>
    %236 = vector.broadcast %235 : vector<2x1xf32> to vector<2x8xf32>
    %237 = arith.cmpf oge, %233, %236 : vector<2x8xf32>
    %c8_i32 = arith.constant 8 : i32
    %238 = vector.broadcast %c8_i32 : i32 to vector<2x8xi32>
    %239 = arith.select %237, %231, %238 : vector<2x8xi1>, vector<2x8xi32>
    %cst_112 = arith.constant dense<2147483647> : vector<2xi32>
    %240 = vector.multi_reduction <minsi>, %239, %cst_112 [1] : vector<2x8xi32> to vector<2xi32>
    %241 = vector.shape_cast %240 : vector<2xi32> to vector<2x1xi32>
    %c0_i32_113 = arith.constant 0 : i32
    %242 = vector.broadcast %c0_i32_113 : i32 to vector<2x1xi32>
    %243 = arith.addi %241, %242 : vector<2x1xi32>
    %244 = vector.broadcast %243 : vector<2x1xi32> to vector<2x64xi32>
    %245 = arith.cmpi eq, %230, %244 : vector<2x64xi32>
    %cst_114 = arith.constant 1.000000e+00 : f32
    %246 = vector.broadcast %cst_114 : f32 to vector<2x64xf32>
    %247 = arith.select %245, %246, %232 : vector<2x64xi1>, vector<2x64xf32>
    %248 = vector.extract_strided_slice %229 {offsets = [0, 8], sizes = [2, 8], strides = [1, 1]} : vector<2x64xf32> to vector<2x8xf32>
    %cst_115 = arith.constant dense<0xFF800000> : vector<2xf32>
    %249 = vector.multi_reduction <maximumf>, %248, %cst_115 [1] : vector<2x8xf32> to vector<2xf32>
    %250 = vector.shape_cast %249 : vector<2xf32> to vector<2x1xf32>
    %251 = vector.broadcast %250 : vector<2x1xf32> to vector<2x8xf32>
    %252 = arith.cmpf oge, %248, %251 : vector<2x8xf32>
    %c8_i32_116 = arith.constant 8 : i32
    %253 = vector.broadcast %c8_i32_116 : i32 to vector<2x8xi32>
    %254 = arith.select %252, %231, %253 : vector<2x8xi1>, vector<2x8xi32>
    %cst_117 = arith.constant dense<2147483647> : vector<2xi32>
    %255 = vector.multi_reduction <minsi>, %254, %cst_117 [1] : vector<2x8xi32> to vector<2xi32>
    %256 = vector.shape_cast %255 : vector<2xi32> to vector<2x1xi32>
    %c8_i32_118 = arith.constant 8 : i32
    %257 = vector.broadcast %c8_i32_118 : i32 to vector<2x1xi32>
    %258 = arith.addi %256, %257 : vector<2x1xi32>
    %259 = vector.broadcast %258 : vector<2x1xi32> to vector<2x64xi32>
    %260 = arith.cmpi eq, %230, %259 : vector<2x64xi32>
    %cst_119 = arith.constant 1.000000e+00 : f32
    %261 = vector.broadcast %cst_119 : f32 to vector<2x64xf32>
    %262 = arith.select %260, %261, %247 : vector<2x64xi1>, vector<2x64xf32>
    %263 = vector.extract_strided_slice %229 {offsets = [0, 16], sizes = [2, 8], strides = [1, 1]} : vector<2x64xf32> to vector<2x8xf32>
    %cst_120 = arith.constant dense<0xFF800000> : vector<2xf32>
    %264 = vector.multi_reduction <maximumf>, %263, %cst_120 [1] : vector<2x8xf32> to vector<2xf32>
    %265 = vector.shape_cast %264 : vector<2xf32> to vector<2x1xf32>
    %266 = vector.broadcast %265 : vector<2x1xf32> to vector<2x8xf32>
    %267 = arith.cmpf oge, %263, %266 : vector<2x8xf32>
    %c8_i32_121 = arith.constant 8 : i32
    %268 = vector.broadcast %c8_i32_121 : i32 to vector<2x8xi32>
    %269 = arith.select %267, %231, %268 : vector<2x8xi1>, vector<2x8xi32>
    %cst_122 = arith.constant dense<2147483647> : vector<2xi32>
    %270 = vector.multi_reduction <minsi>, %269, %cst_122 [1] : vector<2x8xi32> to vector<2xi32>
    %271 = vector.shape_cast %270 : vector<2xi32> to vector<2x1xi32>
    %c16_i32 = arith.constant 16 : i32
    %272 = vector.broadcast %c16_i32 : i32 to vector<2x1xi32>
    %273 = arith.addi %271, %272 : vector<2x1xi32>
    %274 = vector.broadcast %273 : vector<2x1xi32> to vector<2x64xi32>
    %275 = arith.cmpi eq, %230, %274 : vector<2x64xi32>
    %cst_123 = arith.constant 1.000000e+00 : f32
    %276 = vector.broadcast %cst_123 : f32 to vector<2x64xf32>
    %277 = arith.select %275, %276, %262 : vector<2x64xi1>, vector<2x64xf32>
    %278 = vector.extract_strided_slice %229 {offsets = [0, 24], sizes = [2, 8], strides = [1, 1]} : vector<2x64xf32> to vector<2x8xf32>
    %cst_124 = arith.constant dense<0xFF800000> : vector<2xf32>
    %279 = vector.multi_reduction <maximumf>, %278, %cst_124 [1] : vector<2x8xf32> to vector<2xf32>
    %280 = vector.shape_cast %279 : vector<2xf32> to vector<2x1xf32>
    %281 = vector.broadcast %280 : vector<2x1xf32> to vector<2x8xf32>
    %282 = arith.cmpf oge, %278, %281 : vector<2x8xf32>
    %c8_i32_125 = arith.constant 8 : i32
    %283 = vector.broadcast %c8_i32_125 : i32 to vector<2x8xi32>
    %284 = arith.select %282, %231, %283 : vector<2x8xi1>, vector<2x8xi32>
    %cst_126 = arith.constant dense<2147483647> : vector<2xi32>
    %285 = vector.multi_reduction <minsi>, %284, %cst_126 [1] : vector<2x8xi32> to vector<2xi32>
    %286 = vector.shape_cast %285 : vector<2xi32> to vector<2x1xi32>
    %c24_i32 = arith.constant 24 : i32
    %287 = vector.broadcast %c24_i32 : i32 to vector<2x1xi32>
    %288 = arith.addi %286, %287 : vector<2x1xi32>
    %289 = vector.broadcast %288 : vector<2x1xi32> to vector<2x64xi32>
    %290 = arith.cmpi eq, %230, %289 : vector<2x64xi32>
    %cst_127 = arith.constant 1.000000e+00 : f32
    %291 = vector.broadcast %cst_127 : f32 to vector<2x64xf32>
    %292 = arith.select %290, %291, %277 : vector<2x64xi1>, vector<2x64xf32>
    %293 = vector.extract_strided_slice %229 {offsets = [0, 32], sizes = [2, 8], strides = [1, 1]} : vector<2x64xf32> to vector<2x8xf32>
    %cst_128 = arith.constant dense<0xFF800000> : vector<2xf32>
    %294 = vector.multi_reduction <maximumf>, %293, %cst_128 [1] : vector<2x8xf32> to vector<2xf32>
    %295 = vector.shape_cast %294 : vector<2xf32> to vector<2x1xf32>
    %296 = vector.broadcast %295 : vector<2x1xf32> to vector<2x8xf32>
    %297 = arith.cmpf oge, %293, %296 : vector<2x8xf32>
    %c8_i32_129 = arith.constant 8 : i32
    %298 = vector.broadcast %c8_i32_129 : i32 to vector<2x8xi32>
    %299 = arith.select %297, %231, %298 : vector<2x8xi1>, vector<2x8xi32>
    %cst_130 = arith.constant dense<2147483647> : vector<2xi32>
    %300 = vector.multi_reduction <minsi>, %299, %cst_130 [1] : vector<2x8xi32> to vector<2xi32>
    %301 = vector.shape_cast %300 : vector<2xi32> to vector<2x1xi32>
    %c32_i32 = arith.constant 32 : i32
    %302 = vector.broadcast %c32_i32 : i32 to vector<2x1xi32>
    %303 = arith.addi %301, %302 : vector<2x1xi32>
    %304 = vector.broadcast %303 : vector<2x1xi32> to vector<2x64xi32>
    %305 = arith.cmpi eq, %230, %304 : vector<2x64xi32>
    %cst_131 = arith.constant 1.000000e+00 : f32
    %306 = vector.broadcast %cst_131 : f32 to vector<2x64xf32>
    %307 = arith.select %305, %306, %292 : vector<2x64xi1>, vector<2x64xf32>
    %308 = vector.extract_strided_slice %229 {offsets = [0, 40], sizes = [2, 8], strides = [1, 1]} : vector<2x64xf32> to vector<2x8xf32>
    %cst_132 = arith.constant dense<0xFF800000> : vector<2xf32>
    %309 = vector.multi_reduction <maximumf>, %308, %cst_132 [1] : vector<2x8xf32> to vector<2xf32>
    %310 = vector.shape_cast %309 : vector<2xf32> to vector<2x1xf32>
    %311 = vector.broadcast %310 : vector<2x1xf32> to vector<2x8xf32>
    %312 = arith.cmpf oge, %308, %311 : vector<2x8xf32>
    %c8_i32_133 = arith.constant 8 : i32
    %313 = vector.broadcast %c8_i32_133 : i32 to vector<2x8xi32>
    %314 = arith.select %312, %231, %313 : vector<2x8xi1>, vector<2x8xi32>
    %cst_134 = arith.constant dense<2147483647> : vector<2xi32>
    %315 = vector.multi_reduction <minsi>, %314, %cst_134 [1] : vector<2x8xi32> to vector<2xi32>
    %316 = vector.shape_cast %315 : vector<2xi32> to vector<2x1xi32>
    %c40_i32 = arith.constant 40 : i32
    %317 = vector.broadcast %c40_i32 : i32 to vector<2x1xi32>
    %318 = arith.addi %316, %317 : vector<2x1xi32>
    %319 = vector.broadcast %318 : vector<2x1xi32> to vector<2x64xi32>
    %320 = arith.cmpi eq, %230, %319 : vector<2x64xi32>
    %cst_135 = arith.constant 1.000000e+00 : f32
    %321 = vector.broadcast %cst_135 : f32 to vector<2x64xf32>
    %322 = arith.select %320, %321, %307 : vector<2x64xi1>, vector<2x64xf32>
    %323 = vector.extract_strided_slice %229 {offsets = [0, 48], sizes = [2, 8], strides = [1, 1]} : vector<2x64xf32> to vector<2x8xf32>
    %cst_136 = arith.constant dense<0xFF800000> : vector<2xf32>
    %324 = vector.multi_reduction <maximumf>, %323, %cst_136 [1] : vector<2x8xf32> to vector<2xf32>
    %325 = vector.shape_cast %324 : vector<2xf32> to vector<2x1xf32>
    %326 = vector.broadcast %325 : vector<2x1xf32> to vector<2x8xf32>
    %327 = arith.cmpf oge, %323, %326 : vector<2x8xf32>
    %c8_i32_137 = arith.constant 8 : i32
    %328 = vector.broadcast %c8_i32_137 : i32 to vector<2x8xi32>
    %329 = arith.select %327, %231, %328 : vector<2x8xi1>, vector<2x8xi32>
    %cst_138 = arith.constant dense<2147483647> : vector<2xi32>
    %330 = vector.multi_reduction <minsi>, %329, %cst_138 [1] : vector<2x8xi32> to vector<2xi32>
    %331 = vector.shape_cast %330 : vector<2xi32> to vector<2x1xi32>
    %c48_i32 = arith.constant 48 : i32
    %332 = vector.broadcast %c48_i32 : i32 to vector<2x1xi32>
    %333 = arith.addi %331, %332 : vector<2x1xi32>
    %334 = vector.broadcast %333 : vector<2x1xi32> to vector<2x64xi32>
    %335 = arith.cmpi eq, %230, %334 : vector<2x64xi32>
    %cst_139 = arith.constant 1.000000e+00 : f32
    %336 = vector.broadcast %cst_139 : f32 to vector<2x64xf32>
    %337 = arith.select %335, %336, %322 : vector<2x64xi1>, vector<2x64xf32>
    %338 = vector.extract_strided_slice %229 {offsets = [0, 56], sizes = [2, 8], strides = [1, 1]} : vector<2x64xf32> to vector<2x8xf32>
    %cst_140 = arith.constant dense<0xFF800000> : vector<2xf32>
    %339 = vector.multi_reduction <maximumf>, %338, %cst_140 [1] : vector<2x8xf32> to vector<2xf32>
    %340 = vector.shape_cast %339 : vector<2xf32> to vector<2x1xf32>
    %341 = vector.broadcast %340 : vector<2x1xf32> to vector<2x8xf32>
    %342 = arith.cmpf oge, %338, %341 : vector<2x8xf32>
    %c8_i32_141 = arith.constant 8 : i32
    %343 = vector.broadcast %c8_i32_141 : i32 to vector<2x8xi32>
    %344 = arith.select %342, %231, %343 : vector<2x8xi1>, vector<2x8xi32>
    %cst_142 = arith.constant dense<2147483647> : vector<2xi32>
    %345 = vector.multi_reduction <minsi>, %344, %cst_142 [1] : vector<2x8xi32> to vector<2xi32>
    %346 = vector.shape_cast %345 : vector<2xi32> to vector<2x1xi32>
    %c56_i32 = arith.constant 56 : i32
    %347 = vector.broadcast %c56_i32 : i32 to vector<2x1xi32>
    %348 = arith.addi %346, %347 : vector<2x1xi32>
    %349 = vector.broadcast %348 : vector<2x1xi32> to vector<2x64xi32>
    %350 = arith.cmpi eq, %230, %349 : vector<2x64xi32>
    %cst_143 = arith.constant 1.000000e+00 : f32
    %351 = vector.broadcast %cst_143 : f32 to vector<2x64xf32>
    %352 = arith.select %350, %351, %337 : vector<2x64xi1>, vector<2x64xf32>
    %353 = vector.extract_strided_slice %352 {offsets = [0, 32], sizes = [2, 32], strides = [1, 1]} : vector<2x64xf32> to vector<2x32xf32>
    %c0_144 = arith.constant 0 : index
    %c0_145 = arith.constant 0 : index
    %354 = vector.load %arg7[%c0_144, %c0_145] : memref<2x32xf32, #tpu.memory_space<vmem>>, vector<2x32xf32>
    tpu.vector_store %arg7[%c0_144, %c0_145], %353 {strides = array<i32>} : memref<2x32xf32, #tpu.memory_space<vmem>>, vector<2x32xf32>,
    %c0_146 = arith.constant 0 : index
    %c0_147 = arith.constant 0 : index
    %355 = vector.load %arg8[%c0_146, %c0_147] : memref<2x32xf32, #tpu.memory_space<vmem>>, vector<2x32xf32>
    tpu.vector_store %arg8[%c0_146, %c0_147], %210 {strides = array<i32>} : memref<2x32xf32, #tpu.memory_space<vmem>>, vector<2x32xf32>,
    %356 = tpu.concatenate %210, %229, %352 in 1 : vector<2x32xf32>, vector<2x64xf32>, vector<2x64xf32> -> vector<2x160xf32>
    %c0_148 = arith.constant 0 : index
    %c0_149 = arith.constant 0 : index
    %c0_150 = arith.constant 0 : index
    %357 = vector.load %arg6[%c0_148, %c0_149, %c0_150] : memref<1x2x160xf32, #tpu.memory_space<vmem>>, vector<1x2x160xf32>
    %358 = vector.shape_cast %357 : vector<1x2x160xf32> to vector<2x160xf32>
    %359 = vector.shape_cast %356 : vector<2x160xf32> to vector<1x2x160xf32>
    tpu.vector_store %arg6[%c0_148, %c0_149, %c0_150], %359 {strides = array<i32>} : memref<1x2x160xf32, #tpu.memory_space<vmem>>, vector<1x2x160xf32>,
    return
  }
  func.func @transform_0(%arg0: i32) -> (i32, i32, i32) {
    %c0_i32 = arith.constant 0 : i32
    %c0_i32_0 = arith.constant 0 : i32
    %c0_i32_1 = arith.constant 0 : i32
    return %arg0, %c0_i32, %c0_i32_0 : i32, i32, i32
  }
  func.func @transform_1(%arg0: i32) -> (i32, i32) {
    %c0_i32 = arith.constant 0 : i32
    %c0_i32_0 = arith.constant 0 : i32
    %c0_i32_1 = arith.constant 0 : i32
    return %c0_i32, %c0_i32_0 : i32, i32
  }
  func.func @transform_2(%arg0: i32) -> (i32, i32) {
    %c0_i32 = arith.constant 0 : i32
    %c0_i32_0 = arith.constant 0 : i32
    %c0_i32_1 = arith.constant 0 : i32
    return %c0_i32, %c0_i32_0 : i32, i32
  }
  func.func @transform_3(%arg0: i32) -> (i32, i32, i32) {
    %c0_i32 = arith.constant 0 : i32
    %c0_i32_0 = arith.constant 0 : i32
    %c0_i32_1 = arith.constant 0 : i32
    %c0_i32_2 = arith.constant 0 : i32
    return %c0_i32, %c0_i32_0, %c0_i32_1 : i32, i32, i32
  }
  func.func @transform_4(%arg0: i32) -> (i32, i32, i32) {
    %c0_i32 = arith.constant 0 : i32
    %c0_i32_0 = arith.constant 0 : i32
    %c0_i32_1 = arith.constant 0 : i32
    %c0_i32_2 = arith.constant 0 : i32
    return %c0_i32, %c0_i32_0, %c0_i32_1 : i32, i32, i32
  }
  func.func @transform_5(%arg0: i32) -> (i32, i32, i32) {
    %c0_i32 = arith.constant 0 : i32
    %c0_i32_0 = arith.constant 0 : i32
    %c0_i32_1 = arith.constant 0 : i32
    return %arg0, %c0_i32, %c0_i32_0 : i32, i32, i32
  }
}

</mosaic_0001>

<llo_original>
// kernel: tpu_custom_call.1
$region0: #{tpu_custom_call.1}
  #allocation0 [shape = 'u32[]', space=smem, size = 0x4, offset = 0x4, fixed_abs, tag = 'smem constant byte address 0x4 - core index']
  #allocation1 [shape = 'u32[144,128]{1,0:T(1,128)}', space=vmem, size = 0x12000, scoped, tag = 'internal scratch']
  #allocation2 [shape = 'f32[2,32]{1,0:T(2,128)}', space=vmem, size = 0x400, scoped, tag = 'scratch operand']
  #allocation3 [shape = 'f32[2,32]{1,0:T(2,128)}', space=vmem, size = 0x400, scoped, tag = 'scratch operand']
  %s0 = inlined_call_operand.hbm [shape: f32[1,2,40], index: 0, kind: input, shape index: {}]
  %s1 = inlined_call_operand.vmem [shape: f32[2,32], index: 1, kind: input, shape index: {}]
  %s2 = inlined_call_operand.vmem [shape: f32[2,32], index: 2, kind: input, shape index: {}]
  %s3 = inlined_call_operand.hbm [shape: bf16[10,72,128], index: 3, kind: input, shape index: {}]
  %s4 = inlined_call_operand.hbm [shape: f32[16,1,128], index: 4, kind: input, shape index: {}]
  %s5 = inlined_call_operand.hbm [shape: f32[1,2,160], index: 5, kind: output, shape index: {}]
  %s6 = sld [smem:[#allocation0]]
  $region46: #{tpu_custom_call.1} parent=0
    _
  %s8 = ssub.s32 1, %s6
  %s9 = scalar_select 0, %s8, %s6
  $region1: #{tpu_custom_call.1} parent=0
    #allocation4 [shape = 'u8[1024]{0}', space=vmem, size = 0x400, scoped, tag = 'input window, operand 0, single buffered']
    #allocation5 [shape = 's32[1]{0}', space=sflag, size = 0x4, scoped, tag = 'scoped memory for tpu_custom_call.1']
    #allocation6 [shape = 's32[1]{0}', space=sflag, size = 0x4, scoped, tag = 'scoped memory for tpu_custom_call.1']
    #allocation7 [shape = 'u8[184320]{0}', space=vmem, size = 0x2d000, scoped, tag = 'input window, operand 3, single buffered']
    #allocation8 [shape = 's32[1]{0}', space=sflag, size = 0x4, scoped, tag = 'scoped memory for tpu_custom_call.1']
    #allocation9 [shape = 'u8[8192]{0}', space=vmem, size = 0x2000, scoped, tag = 'input window, operand 4, single buffered']
    #allocation10 [shape = 'u8[2048]{0}', space=vmem, size = 0x800, scoped, tag = 'output window, operand 0, single buffered']
    %10 = vsyncpa [#allocation5], 0
    %11 = vsyncpa [#allocation8], 0
    %12 = vsyncpa [#allocation6], 0
    // Predicated region
    $region2: #{tpu_custom_call.1} parent=1 // pred_check
      _
    $region3: #{tpu_custom_call.1} parent=1 // pred_check_branch
      %14 = sbr.rel (0) target = $region5
    $region4: #{tpu_custom_call.1} parent=1 // pred_region
      %s16 = ssub.s32 32, 32
      %17 = vsyncadd [#allocation5], %s16
      %s19 = sshll.u32 [#allocation4], 4
      %s20 = int_to_ptr.vmem [resolvable:$true] %s19
      %22 = dma.hbm_to_vmem [thread:$0]  %s0, 32, %s20, [#allocation5]
    $region5: #{tpu_custom_call.1} parent=1 // pred_fallthru
      _
    // Predicated region
    $region6: #{tpu_custom_call.1} parent=1 // pred_check
      _
    $region7: #{tpu_custom_call.1} parent=1 // pred_check_branch
      %24 = sbr.rel (0) target = $region9
    $region8: #{tpu_custom_call.1} parent=1 // pred_region
      _
    $region9: #{tpu_custom_call.1} parent=1 // pred_fallthru
      _
    // Predicated region
    $region10: #{tpu_custom_call.1} parent=1 // pred_check
      _
    $region11: #{tpu_custom_call.1} parent=1 // pred_check_branch
      %26 = sbr.rel (0) target = $region13
    $region12: #{tpu_custom_call.1} parent=1 // pred_region
      _
    $region13: #{tpu_custom_call.1} parent=1 // pred_fallthru
      _
    // Predicated region
    $region14: #{tpu_custom_call.1} parent=1 // pred_check
      _
    $region15: #{tpu_custom_call.1} parent=1 // pred_check_branch
      %28 = sbr.rel (0) target = $region17
    $region16: #{tpu_custom_call.1} parent=1 // pred_region
      %s30 = ssub.s32 5760, 5760
      %31 = vsyncadd [#allocation8], %s30
      %s32 = sshll.u32 [#allocation7], 4
      %s33 = int_to_ptr.vmem [resolvable:$true] %s32
      %38 = dma.hbm_to_vmem [thread:$0]  %s3, 5760, %s33, [#allocation8], 64, 64, 4
    $region17: #{tpu_custom_call.1} parent=1 // pred_fallthru
      _
    // Predicated region
    $region18: #{tpu_custom_call.1} parent=1 // pred_check
      _
    $region19: #{tpu_custom_call.1} parent=1 // pred_check_branch
      %40 = sbr.rel (0) target = $region21
    $region20: #{tpu_custom_call.1} parent=1 // pred_region
      %s42 = ssub.s32 256, 256
      %43 = vsyncadd [#allocation8], %s42
      %s44 = sshll.u32 [#allocation9], 4
      %s45 = int_to_ptr.vmem [resolvable:$true] %s44
      %50 = dma.hbm_to_vmem [thread:$0]  %s4, 256, %s45, [#allocation8], 16, 16, 1
    $region21: #{tpu_custom_call.1} parent=1 // pred_fallthru
      _
    // Predicated region
    $region22: #{tpu_custom_call.1} parent=1 // pred_check
      _
    $region23: #{tpu_custom_call.1} parent=1 // pred_check_branch
      %52 = sbr.rel (0) target = $region25
    $region24: #{tpu_custom_call.1} parent=1 // pred_region
      %53 = dma.done [#allocation5], 32
    $region25: #{tpu_custom_call.1} parent=1 // pred_fallthru
      _
    // Predicated region
    $region26: #{tpu_custom_call.1} parent=1 // pred_check
      _
    $region27: #{tpu_custom_call.1} parent=1 // pred_check_branch
      %55 = sbr.rel (0) target = $region29
    $region28: #{tpu_custom_call.1} parent=1 // pred_region
      %56 = dma.done [#allocation8], 5760
    $region29: #{tpu_custom_call.1} parent=1 // pred_fallthru
      _
    // Predicated region
    $region30: #{tpu_custom_call.1} parent=1 // pred_check
      _
    $region31: #{tpu_custom_call.1} parent=1 // pred_check_branch
      %58 = sbr.rel (0) target = $region33
    $region32: #{tpu_custom_call.1} parent=1 // pred_region
      %59 = dma.done [#allocation8], 256
    $region33: #{tpu_custom_call.1} parent=1 // pred_fallthru
      _
    %p61 = scmp.eq.s32.totalorder 0, 0
    // Predicated region
    $region34: #{tpu_custom_call.1} parent=1 // pred_check
      %p62 = pneg %p61
    $region35: #{tpu_custom_call.1} parent=1 // pred_check_branch
      %64 = sbr.rel (%p62) target = $region37
    $region36: #{tpu_custom_call.1} parent=1 // pred_region
      %v65 = vld [vmem:[%s1] sm:$0x3]
      %vm66 = vcmask 254976
      %67 = vst.msk [vmem:[#allocation2] sm:$0x3] %vm66, %v65
      %v68 = vld [vmem:[%s2] sm:$0x3]
      %69 = vst.msk [vmem:[#allocation3] sm:$0x3] %vm66, %v68
    $region37: #{tpu_custom_call.1} parent=1 // pred_fallthru
      _
    %v70 = vld [vmem:[#allocation2] sm:$0x3]
    %v71 = vld [vmem:[#allocation3] sm:$0x3]
    %v72 = vld [vmem:[#allocation4] sm:$0x3]
    %74 = vrot.lane.b32.xlu0 %v70, 40
    %v75 = vpop.permute.xlu0 %74
    %vm77 = vcmask 326656
    %v78 = vsel %vm77, %v72, %v75
    %v79 = vld [vmem:[#allocation7] sm:$0xf]
    %v80 = vld [vmem:[#allocation7 + $0x4] sm:$0xf]
    %v81 = vld [vmem:[#allocation7 + $0x8] sm:$0xf]
    %v82 = vld [vmem:[#allocation7 + $0xc] sm:$0xf]
    %v83 = vld [vmem:[#allocation7 + $0x10] sm:$0xf]
    %v84 = vld [vmem:[#allocation7 + $0x14] sm:$0xf]
    %v85 = vld [vmem:[#allocation7 + $0x18] sm:$0xf]
    %v86 = vld [vmem:[#allocation7 + $0x1c] sm:$0xf]
    %v87 = vld [vmem:[#allocation7 + $0x20] sm:$0xf]
    %v88 = vpack.c.bf16 %v78, %v78
    %v98 = vunpack.c.l.b16 %v79
    %v99 = vunpack.c.l.b16 %v80
    %v100 = vunpack.c.l.b16 %v81
    %v101 = vunpack.c.l.b16 %v82
    %v102 = vunpack.c.l.b16 %v83
    %v103 = vunpack.c.l.b16 %v84
    %v104 = vunpack.c.l.b16 %v85
    %v105 = vunpack.c.l.b16 %v86
    %v106 = vunpack.c.l.b16 %v87
    %v107 = vpack.c.b16 %v99, %v98
    %v108 = vpack.c.b16 %v101, %v100
    %v109 = vpack.c.b16 %v103, %v102
    %v110 = vpack.c.b16 %v105, %v104
    %v111 = vpack.c.b16 %v106, %v106
    %vm116 = vcmask 588800
    %v118 = vsel %vm116, %v88, 0
    %vm120 = vcmask 1043456
    %v122 = vsel %vm120, %v111, 0
    %124 = vmatprep.subr.bf16.mxu0 0
    %125 = vmatpush1.bf16.msra.mxu0 %v107
    %126 = vmatprep.subr.bf16.mxu0 0
    %127 = vmatpush1.bf16.msra.mxu0 %v108
    %128 = vmatprep.subr.bf16.mxu0 0
    %129 = vmatpush1.bf16.msra.mxu0 %v109
    %130 = vmatprep.subr.bf16.mxu0 0
    %131 = vmatpush1.bf16.msra.mxu0 %v110
    %132 = vmatprep.subr.bf16.mxu0 0
    %133 = vmatpush1.bf16.msra.mxu0 %v122
    %134 = vmatprep.subr.bf16.mxu0 0
    %135 = vmatpush1.bf16.msra.mxu0 0
    %136 = vmatprep.subr.bf16.mxu0 0
    %137 = vmatpush1.bf16.msra.mxu0 0
    %138 = vmatprep.subr.bf16.mxu0 0
    %139 = vmatpush1.bf16.msra.mxu0 0
    %140 = vmatprep.subr.bf16.mxu0 0
    %141 = vmatpush1.bf16.msra.mxu0 0
    %142 = vmatprep.subr.bf16.mxu0 0
    %143 = vmatpush1.bf16.msra.mxu0 0
    %144 = vmatprep.subr.bf16.mxu0 0
    %145 = vmatpush1.bf16.msra.mxu0 0
    %146 = vmatprep.subr.bf16.mxu0 0
    %147 = vmatpush1.bf16.msra.mxu0 0
    %148 = vmatprep.subr.bf16.mxu0 0
    %149 = vmatpush1.bf16.msra.mxu0 0
    %150 = vmatprep.subr.bf16.mxu0 0
    %151 = vmatpush1.bf16.msra.mxu0 0
    %152 = vmatprep.subr.bf16.mxu0 0
    %153 = vmatpush1.bf16.msra.mxu0 0
    %154 = vmatprep.subr.bf16.mxu0 0
    %155 = vmatpush1.bf16.msra.mxu0 0
    %156 = vmatprep.mubr.bf16.mxu0 0
    %157 = vmatmul.mubr.bf16.gmra.mrb[0].mxu0 %v118
    %v158 = vpop.f32.mrb[0].mxu0
    %v159 = vadd.f32 0.0, %v158
    %v160 = vpop.f32.mrb[0].mxu0
    %v161 = vpop.f32.mrb[0].mxu0
    %v162 = vpop.f32.mrb[0].mxu0
    %163 = vdwg.mxu0
    %v164 = vld [vmem:[#allocation9] sm:$0x1]
    %v166 = vlaneseq
    %v167 = vshrl.u32 %v166, 7
    %v168 = vsub.s32 0, %v167
    %v169 = vrot.slane %v164, %v168
    %v171 = vadd.f32 %v159, %v169
    %v172 = vmax.f32 %v171, 0.0
    %s173 = scalar_lea.vmem [#allocation7], 36
    %v174 = vld [vmem:[%s173] sm:$0xf]
    %v175 = vld [vmem:[%s173 + $0x4] sm:$0xf]
    %v176 = vld [vmem:[%s173 + $0x8] sm:$0xf]
    %v177 = vld [vmem:[%s173 + $0xc] sm:$0xf]
    %v178 = vpack.c.bf16 %v172, %v172
    %v183 = vunpack.c.l.b16 %v174
    %v184 = vunpack.c.l.b16 %v175
    %v185 = vunpack.c.l.b16 %v176
    %v186 = vunpack.c.l.b16 %v177
    %v187 = vpack.c.b16 %v184, %v183
    %v188 = vpack.c.b16 %v186, %v185
    %vm191 = vcmask 261120
    %v193 = vsel %vm191, %v178, 0
    %195 = vmatprep.subr.bf16.mxu0 0
    %196 = vmatpush1.bf16.msra.mxu0 %v187
    %197 = vmatprep.subr.bf16.mxu0 0
    %198 = vmatpush1.bf16.msra.mxu0 %v188
    %199 = vmatprep.subr.bf16.mxu0 0
    %200 = vmatpush1.bf16.msra.mxu0 0
    %201 = vmatprep.subr.bf16.mxu0 0
    %202 = vmatpush1.bf16.msra.mxu0 0
    %203 = vmatprep.subr.bf16.mxu0 0
    %204 = vmatpush1.bf16.msra.mxu0 0
    %205 = vmatprep.subr.bf16.mxu0 0
    %206 = vmatpush1.bf16.msra.mxu0 0
    %207 = vmatprep.subr.bf16.mxu0 0
    %208 = vmatpush1.bf16.msra.mxu0 0
    %209 = vmatprep.subr.bf16.mxu0 0
    %210 = vmatpush1.bf16.msra.mxu0 0
    %211 = vmatprep.subr.bf16.mxu0 0
    %212 = vmatpush1.bf16.msra.mxu0 0
    %213 = vmatprep.subr.bf16.mxu0 0
    %214 = vmatpush1.bf16.msra.mxu0 0
    %215 = vmatprep.subr.bf16.mxu0 0
    %216 = vmatpush1.bf16.msra.mxu0 0
    %217 = vmatprep.subr.bf16.mxu0 0
    %218 = vmatpush1.bf16.msra.mxu0 0
    %219 = vmatprep.subr.bf16.mxu0 0
    %220 = vmatpush1.bf16.msra.mxu0 0
    %221 = vmatprep.subr.bf16.mxu0 0
    %222 = vmatpush1.bf16.msra.mxu0 0
    %223 = vmatprep.subr.bf16.mxu0 0
    %224 = vmatpush1.bf16.msra.mxu0 0
    %225 = vmatprep.subr.bf16.mxu0 0
    %226 = vmatpush1.bf16.msra.mxu0 0
    %227 = vmatprep.mubr.bf16.mxu0 0
    %228 = vmatmul.mubr.bf16.gmra.mrb[0].mxu0 %v193
    %v229 = vpop.f32.mrb[0].mxu0
    %v230 = vadd.f32 %v172, %v229
    %v231 = vpop.f32.mrb[0].mxu0
    %v232 = vpop.f32.mrb[0].mxu0
    %v233 = vpop.f32.mrb[0].mxu0
    %234 = vdwg.mxu0
    %s235 = scalar_lea.vmem [#allocation9], 1
    %v236 = vld [vmem:[%s235] sm:$0x1]
    %s237 = scalar_lea.vmem [#allocation9], 2
    %v238 = vld [vmem:[%s237] sm:$0x1]
    %vm239 = vcmask 254976
    %v240 = vsel %vm239, %v230, 0.0
    %241 = vadd.xlane.f32.xlu0 %v240
    %v242 = vpop.xlane.xlu0 %241
    %v243 = vmul.f32 %v242, 0.03125
    %v244 = vmul.f32 %v230, %v230
    %v245 = vsel %vm239, %v244, 0.0
    %246 = vadd.xlane.f32.xlu0 %v245
    %v247 = vpop.xlane.xlu0 %246
    %v248 = vmul.f32 %v247, 0.03125
    %v249 = vmul.f32 %v243, %v243
    %v250 = vsub.f32 %v248, %v249
    %v251 = vmax.f32 %v250, 0.0
    %v252 = vsub.f32 %v230, %v243
    %v253 = vadd.f32 %v251, 1e-05
    %v254 = vrsqrt.pop %v253
    %v255 = vmul.f32 %v252, %v254
    %v257 = vlaneseq
    %v258 = vshrl.u32 %v257, 7
    %v259 = vsub.s32 0, %v258
    %v260 = vrot.slane %v236, %v259
    %v262 = vmul.f32 %v255, %v260
    %v264 = vlaneseq
    %v265 = vshrl.u32 %v264, 7
    %v266 = vsub.s32 0, %v265
    %v267 = vrot.slane %v238, %v266
    %v269 = vadd.f32 %v262, %v267
    %s270 = scalar_lea.vmem [#allocation7], 72
    %v271 = vld [vmem:[%s270] sm:$0xf]
    %v272 = vld [vmem:[%s270 + $0x4] sm:$0xf]
    %v273 = vld [vmem:[%s270 + $0x8] sm:$0xf]
    %v274 = vld [vmem:[%s270 + $0xc] sm:$0xf]
    %v275 = vpack.c.bf16 %v269, %v269
    %s276 = scalar_lea.vmem [#allocation9], 3
    %v277 = vld [vmem:[%s276] sm:$0x1]
    %v279 = vlaneseq
    %v280 = vshrl.u32 %v279, 7
    %v281 = vsub.s32 0, %v280
    %v282 = vrot.slane %v277, %v281
    %v288 = vunpack.c.l.b16 %v271
    %v289 = vunpack.c.l.b16 %v272
    %v290 = vunpack.c.l.b16 %v273
    %v291 = vunpack.c.l.b16 %v274
    %v292 = vpack.c.b16 %v289, %v288
    %v293 = vpack.c.b16 %v291, %v290
    %v297 = vsel %vm191, %v275, 0
    %299 = vmatprep.subr.bf16.mxu0 0
    %300 = vmatpush1.bf16.msra.mxu0 %v292
    %301 = vmatprep.subr.bf16.mxu0 0
    %302 = vmatpush1.bf16.msra.mxu0 %v293
    %303 = vmatprep.subr.bf16.mxu0 0
    %304 = vmatpush1.bf16.msra.mxu0 0
    %305 = vmatprep.subr.bf16.mxu0 0
    %306 = vmatpush1.bf16.msra.mxu0 0
    %307 = vmatprep.subr.bf16.mxu0 0
    %308 = vmatpush1.bf16.msra.mxu0 0
    %309 = vmatprep.subr.bf16.mxu0 0
    %310 = vmatpush1.bf16.msra.mxu0 0
    %311 = vmatprep.subr.bf16.mxu0 0
    %312 = vmatpush1.bf16.msra.mxu0 0
    %313 = vmatprep.subr.bf16.mxu0 0
    %314 = vmatpush1.bf16.msra.mxu0 0
    %315 = vmatprep.subr.bf16.mxu0 0
    %316 = vmatpush1.bf16.msra.mxu0 0
    %317 = vmatprep.subr.bf16.mxu0 0
    %318 = vmatpush1.bf16.msra.mxu0 0
    %319 = vmatprep.subr.bf16.mxu0 0
    %320 = vmatpush1.bf16.msra.mxu0 0
    %321 = vmatprep.subr.bf16.mxu0 0
    %322 = vmatpush1.bf16.msra.mxu0 0
    %323 = vmatprep.subr.bf16.mxu0 0
    %324 = vmatpush1.bf16.msra.mxu0 0
    %325 = vmatprep.subr.bf16.mxu0 0
    %326 = vmatpush1.bf16.msra.mxu0 0
    %327 = vmatprep.subr.bf16.mxu0 0
    %328 = vmatpush1.bf16.msra.mxu0 0
    %329 = vmatprep.subr.bf16.mxu0 0
    %330 = vmatpush1.bf16.msra.mxu0 0
    %331 = vmatprep.mubr.bf16.mxu0 0
    %332 = vmatmul.mubr.bf16.gmra.mrb[0].mxu0 %v297
    %v333 = vpop.f32.mrb[0].mxu0
    %v334 = vadd.f32 %v282, %v333
    %v335 = vpop.f32.mrb[0].mxu0
    %v336 = vpop.f32.mrb[0].mxu0
    %v337 = vpop.f32.mrb[0].mxu0
    %338 = vdwg.mxu0
    %v339 = vmax.f32 %v334, 0.0
    %s340 = scalar_lea.vmem [#allocation7], 108
    %v341 = vld [vmem:[%s340] sm:$0xf]
    %v342 = vld [vmem:[%s340 + $0x4] sm:$0xf]
    %v343 = vld [vmem:[%s340 + $0x8] sm:$0xf]
    %v344 = vld [vmem:[%s340 + $0xc] sm:$0xf]
    %v345 = vpack.c.bf16 %v339, %v339
    %s346 = scalar_lea.vmem [#allocation9], 4
    %v347 = vld [vmem:[%s346] sm:$0x1]
    %v349 = vlaneseq
    %v350 = vshrl.u32 %v349, 7
    %v351 = vsub.s32 0, %v350
    %v352 = vrot.slane %v347, %v351
    %v358 = vunpack.c.l.b16 %v341
    %v359 = vunpack.c.l.b16 %v342
    %v360 = vunpack.c.l.b16 %v343
    %v361 = vunpack.c.l.b16 %v344
    %v362 = vpack.c.b16 %v359, %v358
    %v363 = vpack.c.b16 %v361, %v360
    %v367 = vsel %vm191, %v345, 0
    %369 = vmatprep.subr.bf16.mxu0 0
    %370 = vmatpush1.bf16.msra.mxu0 %v362
    %371 = vmatprep.subr.bf16.mxu0 0
    %372 = vmatpush1.bf16.msra.mxu0 %v363
    %373 = vmatprep.subr.bf16.mxu0 0
    %374 = vmatpush1.bf16.msra.mxu0 0
    %375 = vmatprep.subr.bf16.mxu0 0
    %376 = vmatpush1.bf16.msra.mxu0 0
    %377 = vmatprep.subr.bf16.mxu0 0
    %378 = vmatpush1.bf16.msra.mxu0 0
    %379 = vmatprep.subr.bf16.mxu0 0
    %380 = vmatpush1.bf16.msra.mxu0 0
    %381 = vmatprep.subr.bf16.mxu0 0
    %382 = vmatpush1.bf16.msra.mxu0 0
    %383 = vmatprep.subr.bf16.mxu0 0
    %384 = vmatpush1.bf16.msra.mxu0 0
    %385 = vmatprep.subr.bf16.mxu0 0
    %386 = vmatpush1.bf16.msra.mxu0 0
    %387 = vmatprep.subr.bf16.mxu0 0
    %388 = vmatpush1.bf16.msra.mxu0 0
    %389 = vmatprep.subr.bf16.mxu0 0
    %390 = vmatpush1.bf16.msra.mxu0 0
    %391 = vmatprep.subr.bf16.mxu0 0
    %392 = vmatpush1.bf16.msra.mxu0 0
    %393 = vmatprep.subr.bf16.mxu0 0
    %394 = vmatpush1.bf16.msra.mxu0 0
    %395 = vmatprep.subr.bf16.mxu0 0
    %396 = vmatpush1.bf16.msra.mxu0 0
    %397 = vmatprep.subr.bf16.mxu0 0
    %398 = vmatpush1.bf16.msra.mxu0 0
    %399 = vmatprep.subr.bf16.mxu0 0
    %400 = vmatpush1.bf16.msra.mxu0 0
    %401 = vmatprep.mubr.bf16.mxu0 0
    %402 = vmatmul.mubr.bf16.gmra.mrb[0].mxu0 %v367
    %v403 = vpop.f32.mrb[0].mxu0
    %v404 = vadd.f32 %v352, %v403
    %v405 = vpop.f32.mrb[0].mxu0
    %v406 = vpop.f32.mrb[0].mxu0
    %v407 = vpop.f32.mrb[0].mxu0
    %408 = vdwg.mxu0
    %v409 = vadd.f32 %v404, %v269
    %s410 = scalar_lea.vmem [#allocation9], 5
    %v411 = vld [vmem:[%s410] sm:$0x1]
    %s412 = scalar_lea.vmem [#allocation9], 6
    %v413 = vld [vmem:[%s412] sm:$0x1]
    %v414 = vsel %vm239, %v409, 0.0
    %415 = vadd.xlane.f32.xlu0 %v414
    %v416 = vpop.xlane.xlu0 %415
    %v417 = vmul.f32 %v416, 0.03125
    %v418 = vmul.f32 %v409, %v409
    %v419 = vsel %vm239, %v418, 0.0
    %420 = vadd.xlane.f32.xlu0 %v419
    %v421 = vpop.xlane.xlu0 %420
    %v422 = vmul.f32 %v421, 0.03125
    %v423 = vmul.f32 %v417, %v417
    %v424 = vsub.f32 %v422, %v423
    %v425 = vmax.f32 %v424, 0.0
    %v426 = vsub.f32 %v409, %v417
    %v427 = vadd.f32 %v425, 1e-05
    %v428 = vrsqrt.pop %v427
    %v429 = vmul.f32 %v426, %v428
    %v431 = vlaneseq
    %v432 = vshrl.u32 %v431, 7
    %v433 = vsub.s32 0, %v432
    %v434 = vrot.slane %v411, %v433
    %v436 = vmul.f32 %v429, %v434
    %v438 = vlaneseq
    %v439 = vshrl.u32 %v438, 7
    %v440 = vsub.s32 0, %v439
    %v441 = vrot.slane %v413, %v440
    %v443 = vadd.f32 %v436, %v441
    %s444 = scalar_lea.vmem [#allocation7], 144
    %v445 = vld [vmem:[%s444] sm:$0xf]
    %v446 = vld [vmem:[%s444 + $0x4] sm:$0xf]
    %v447 = vld [vmem:[%s444 + $0x8] sm:$0xf]
    %v448 = vld [vmem:[%s444 + $0xc] sm:$0xf]
    %v449 = vpack.c.bf16 %v443, %v443
    %v454 = vunpack.c.l.b16 %v445
    %v455 = vunpack.c.l.b16 %v446
    %v456 = vunpack.c.l.b16 %v447
    %v457 = vunpack.c.l.b16 %v448
    %v458 = vpack.c.b16 %v455, %v454
    %v459 = vpack.c.b16 %v457, %v456
    %v463 = vsel %vm191, %v449, 0
    %465 = vmatprep.subr.bf16.mxu0 0
    %466 = vmatpush1.bf16.msra.mxu0 %v458
    %467 = vmatprep.subr.bf16.mxu0 0
    %468 = vmatpush1.bf16.msra.mxu0 %v459
    %469 = vmatprep.subr.bf16.mxu0 0
    %470 = vmatpush1.bf16.msra.mxu0 0
    %471 = vmatprep.subr.bf16.mxu0 0
    %472 = vmatpush1.bf16.msra.mxu0 0
    %473 = vmatprep.subr.bf16.mxu0 0
    %474 = vmatpush1.bf16.msra.mxu0 0
    %475 = vmatprep.subr.bf16.mxu0 0
    %476 = vmatpush1.bf16.msra.mxu0 0
    %477 = vmatprep.subr.bf16.mxu0 0
    %478 = vmatpush1.bf16.msra.mxu0 0
    %479 = vmatprep.subr.bf16.mxu0 0
    %480 = vmatpush1.bf16.msra.mxu0 0
    %481 = vmatprep.subr.bf16.mxu0 0
    %482 = vmatpush1.bf16.msra.mxu0 0
    %483 = vmatprep.subr.bf16.mxu0 0
    %484 = vmatpush1.bf16.msra.mxu0 0
    %485 = vmatprep.subr.bf16.mxu0 0
    %486 = vmatpush1.bf16.msra.mxu0 0
    %487 = vmatprep.subr.bf16.mxu0 0
    %488 = vmatpush1.bf16.msra.mxu0 0
    %489 = vmatprep.subr.bf16.mxu0 0
    %490 = vmatpush1.bf16.msra.mxu0 0
    %491 = vmatprep.subr.bf16.mxu0 0
    %492 = vmatpush1.bf16.msra.mxu0 0
    %493 = vmatprep.subr.bf16.mxu0 0
    %494 = vmatpush1.bf16.msra.mxu0 0
    %495 = vmatprep.subr.bf16.mxu0 0
    %496 = vmatpush1.bf16.msra.mxu0 0
    %497 = vmatprep.mubr.bf16.mxu0 0
    %498 = vmatmul.mubr.bf16.gmra.mrb[0].mxu0 %v463
    %v499 = vpop.f32.mrb[0].mxu0
    %v500 = vadd.f32 %v443, %v499
    %v501 = vpop.f32.mrb[0].mxu0
    %v502 = vpop.f32.mrb[0].mxu0
    %v503 = vpop.f32.mrb[0].mxu0
    %504 = vdwg.mxu0
    %s505 = scalar_lea.vmem [#allocation9], 7
    %v506 = vld [vmem:[%s505] sm:$0x1]
    %s507 = scalar_lea.vmem [#allocation9], 8
    %v508 = vld [vmem:[%s507] sm:$0x1]
    %v509 = vsel %vm239, %v500, 0.0
    %510 = vadd.xlane.f32.xlu0 %v509
    %v511 = vpop.xlane.xlu0 %510
    %v512 = vmul.f32 %v511, 0.03125
    %v513 = vmul.f32 %v500, %v500
    %v514 = vsel %vm239, %v513, 0.0
    %515 = vadd.xlane.f32.xlu0 %v514
    %v516 = vpop.xlane.xlu0 %515
    %v517 = vmul.f32 %v516, 0.03125
    %v518 = vmul.f32 %v512, %v512
    %v519 = vsub.f32 %v517, %v518
    %v520 = vmax.f32 %v519, 0.0
    %v521 = vsub.f32 %v500, %v512
    %v522 = vadd.f32 %v520, 1e-05
    %v523 = vrsqrt.pop %v522
    %v524 = vmul.f32 %v521, %v523
    %v526 = vlaneseq
    %v527 = vshrl.u32 %v526, 7
    %v528 = vsub.s32 0, %v527
    %v529 = vrot.slane %v506, %v528
    %v531 = vmul.f32 %v524, %v529
    %v533 = vlaneseq
    %v534 = vshrl.u32 %v533, 7
    %v535 = vsub.s32 0, %v534
    %v536 = vrot.slane %v508, %v535
    %v538 = vadd.f32 %v531, %v536
    %s539 = scalar_lea.vmem [#allocation7], 180
    %v540 = vld [vmem:[%s539] sm:$0xf]
    %v541 = vld [vmem:[%s539 + $0x4] sm:$0xf]
    %v542 = vld [vmem:[%s539 + $0x8] sm:$0xf]
    %v543 = vld [vmem:[%s539 + $0xc] sm:$0xf]
    %v544 = vpack.c.bf16 %v538, %v538
    %s545 = scalar_lea.vmem [#allocation9], 9
    %v546 = vld [vmem:[%s545] sm:$0x1]
    %v548 = vlaneseq
    %v549 = vshrl.u32 %v548, 7
    %v550 = vsub.s32 0, %v549
    %v551 = vrot.slane %v546, %v550
    %v557 = vunpack.c.l.b16 %v540
    %v558 = vunpack.c.l.b16 %v541
    %v559 = vunpack.c.l.b16 %v542
    %v560 = vunpack.c.l.b16 %v543
    %v561 = vpack.c.b16 %v558, %v557
    %v562 = vpack.c.b16 %v560, %v559
    %v566 = vsel %vm191, %v544, 0
    %568 = vmatprep.subr.bf16.mxu0 0
    %569 = vmatpush1.bf16.msra.mxu0 %v561
    %570 = vmatprep.subr.bf16.mxu0 0
    %571 = vmatpush1.bf16.msra.mxu0 %v562
    %572 = vmatprep.subr.bf16.mxu0 0
    %573 = vmatpush1.bf16.msra.mxu0 0
    %574 = vmatprep.subr.bf16.mxu0 0
    %575 = vmatpush1.bf16.msra.mxu0 0
    %576 = vmatprep.subr.bf16.mxu0 0
    %577 = vmatpush1.bf16.msra.mxu0 0
    %578 = vmatprep.subr.bf16.mxu0 0
    %579 = vmatpush1.bf16.msra.mxu0 0
    %580 = vmatprep.subr.bf16.mxu0 0
    %581 = vmatpush1.bf16.msra.mxu0 0
    %582 = vmatprep.subr.bf16.mxu0 0
    %583 = vmatpush1.bf16.msra.mxu0 0
    %584 = vmatprep.subr.bf16.mxu0 0
    %585 = vmatpush1.bf16.msra.mxu0 0
    %586 = vmatprep.subr.bf16.mxu0 0
    %587 = vmatpush1.bf16.msra.mxu0 0
    %588 = vmatprep.subr.bf16.mxu0 0
    %589 = vmatpush1.bf16.msra.mxu0 0
    %590 = vmatprep.subr.bf16.mxu0 0
    %591 = vmatpush1.bf16.msra.mxu0 0
    %592 = vmatprep.subr.bf16.mxu0 0
    %593 = vmatpush1.bf16.msra.mxu0 0
    %594 = vmatprep.subr.bf16.mxu0 0
    %595 = vmatpush1.bf16.msra.mxu0 0
    %596 = vmatprep.subr.bf16.mxu0 0
    %597 = vmatpush1.bf16.msra.mxu0 0
    %598 = vmatprep.subr.bf16.mxu0 0
    %599 = vmatpush1.bf16.msra.mxu0 0
    %600 = vmatprep.mubr.bf16.mxu0 0
    %601 = vmatmul.mubr.bf16.gmra.mrb[0].mxu0 %v566
    %v602 = vpop.f32.mrb[0].mxu0
    %v603 = vadd.f32 %v551, %v602
    %v604 = vpop.f32.mrb[0].mxu0
    %v605 = vpop.f32.mrb[0].mxu0
    %v606 = vpop.f32.mrb[0].mxu0
    %607 = vdwg.mxu0
    %v608 = vmax.f32 %v603, 0.0
    %s609 = scalar_lea.vmem [#allocation7], 216
    %v610 = vld [vmem:[%s609] sm:$0xf]
    %v611 = vld [vmem:[%s609 + $0x4] sm:$0xf]
    %v612 = vld [vmem:[%s609 + $0x8] sm:$0xf]
    %v613 = vld [vmem:[%s609 + $0xc] sm:$0xf]
    %v614 = vpack.c.bf16 %v608, %v608
    %s615 = scalar_lea.vmem [#allocation9], 10
    %v616 = vld [vmem:[%s615] sm:$0x1]
    %v618 = vlaneseq
    %v619 = vshrl.u32 %v618, 7
    %v620 = vsub.s32 0, %v619
    %v621 = vrot.slane %v616, %v620
    %v627 = vunpack.c.l.b16 %v610
    %v628 = vunpack.c.l.b16 %v611
    %v629 = vunpack.c.l.b16 %v612
    %v630 = vunpack.c.l.b16 %v613
    %v631 = vpack.c.b16 %v628, %v627
    %v632 = vpack.c.b16 %v630, %v629
    %v636 = vsel %vm191, %v614, 0
    %638 = vmatprep.subr.bf16.mxu0 0
    %639 = vmatpush1.bf16.msra.mxu0 %v631
    %640 = vmatprep.subr.bf16.mxu0 0
    %641 = vmatpush1.bf16.msra.mxu0 %v632
    %642 = vmatprep.subr.bf16.mxu0 0
    %643 = vmatpush1.bf16.msra.mxu0 0
    %644 = vmatprep.subr.bf16.mxu0 0
    %645 = vmatpush1.bf16.msra.mxu0 0
    %646 = vmatprep.subr.bf16.mxu0 0
    %647 = vmatpush1.bf16.msra.mxu0 0
    %648 = vmatprep.subr.bf16.mxu0 0
    %649 = vmatpush1.bf16.msra.mxu0 0
    %650 = vmatprep.subr.bf16.mxu0 0
    %651 = vmatpush1.bf16.msra.mxu0 0
    %652 = vmatprep.subr.bf16.mxu0 0
    %653 = vmatpush1.bf16.msra.mxu0 0
    %654 = vmatprep.subr.bf16.mxu0 0
    %655 = vmatpush1.bf16.msra.mxu0 0
    %656 = vmatprep.subr.bf16.mxu0 0
    %657 = vmatpush1.bf16.msra.mxu0 0
    %658 = vmatprep.subr.bf16.mxu0 0
    %659 = vmatpush1.bf16.msra.mxu0 0
    %660 = vmatprep.subr.bf16.mxu0 0
    %661 = vmatpush1.bf16.msra.mxu0 0
    %662 = vmatprep.subr.bf16.mxu0 0
    %663 = vmatpush1.bf16.msra.mxu0 0
    %664 = vmatprep.subr.bf16.mxu0 0
    %665 = vmatpush1.bf16.msra.mxu0 0
    %666 = vmatprep.subr.bf16.mxu0 0
    %667 = vmatpush1.bf16.msra.mxu0 0
    %668 = vmatprep.subr.bf16.mxu0 0
    %669 = vmatpush1.bf16.msra.mxu0 0
    %670 = vmatprep.mubr.bf16.mxu0 0
    %671 = vmatmul.mubr.bf16.gmra.mrb[0].mxu0 %v636
    %v672 = vpop.f32.mrb[0].mxu0
    %v673 = vadd.f32 %v621, %v672
    %v674 = vpop.f32.mrb[0].mxu0
    %v675 = vpop.f32.mrb[0].mxu0
    %v676 = vpop.f32.mrb[0].mxu0
    %677 = vdwg.mxu0
    %v678 = vadd.f32 %v673, %v538
    %s679 = scalar_lea.vmem [#allocation9], 11
    %v680 = vld [vmem:[%s679] sm:$0x1]
    %s681 = scalar_lea.vmem [#allocation9], 12
    %v682 = vld [vmem:[%s681] sm:$0x1]
    %v683 = vsel %vm239, %v678, 0.0
    %684 = vadd.xlane.f32.xlu0 %v683
    %v685 = vpop.xlane.xlu0 %684
    %v686 = vmul.f32 %v685, 0.03125
    %v687 = vmul.f32 %v678, %v678
    %v688 = vsel %vm239, %v687, 0.0
    %689 = vadd.xlane.f32.xlu0 %v688
    %v690 = vpop.xlane.xlu0 %689
    %v691 = vmul.f32 %v690, 0.03125
    %v692 = vmul.f32 %v686, %v686
    %v693 = vsub.f32 %v691, %v692
    %v694 = vmax.f32 %v693, 0.0
    %v695 = vsub.f32 %v678, %v686
    %v696 = vadd.f32 %v694, 1e-05
    %v697 = vrsqrt.pop %v696
    %v698 = vmul.f32 %v695, %v697
    %v700 = vlaneseq
    %v701 = vshrl.u32 %v700, 7
    %v702 = vsub.s32 0, %v701
    %v703 = vrot.slane %v680, %v702
    %v705 = vmul.f32 %v698, %v703
    %v707 = vlaneseq
    %v708 = vshrl.u32 %v707, 7
    %v709 = vsub.s32 0, %v708
    %v710 = vrot.slane %v682, %v709
    %v712 = vadd.f32 %v705, %v710
    %714 = vrot.lane.b32.xlu0 %v71, 32
    %v715 = vpop.permute.xlu0 %714
    %v717 = vsel %vm191, %v712, %v715
    %s718 = scalar_lea.vmem [#allocation7], 252
    %v719 = vld [vmem:[%s718] sm:$0xf]
    %v720 = vld [vmem:[%s718 + $0x4] sm:$0xf]
    %v721 = vld [vmem:[%s718 + $0x8] sm:$0xf]
    %v722 = vld [vmem:[%s718 + $0xc] sm:$0xf]
    %v723 = vld [vmem:[%s718 + $0x10] sm:$0xf]
    %v724 = vld [vmem:[%s718 + $0x14] sm:$0xf]
    %v725 = vld [vmem:[%s718 + $0x18] sm:$0xf]
    %v726 = vld [vmem:[%s718 + $0x1c] sm:$0xf]
    %v727 = vpack.c.bf16 %v717, %v717
    %s728 = scalar_lea.vmem [#allocation9], 13
    %v729 = vld [vmem:[%s728] sm:$0x1]
    %v731 = vlaneseq
    %v732 = vshrl.u32 %v731, 7
    %v733 = vsub.s32 0, %v732
    %v734 = vrot.slane %v729, %v733
    %v744 = vunpack.c.l.b16 %v719
    %v745 = vunpack.c.l.b16 %v720
    %v746 = vunpack.c.l.b16 %v721
    %v747 = vunpack.c.l.b16 %v722
    %v748 = vunpack.c.l.b16 %v723
    %v749 = vunpack.c.l.b16 %v724
    %v750 = vunpack.c.l.b16 %v725
    %v751 = vunpack.c.l.b16 %v726
    %v752 = vpack.c.b16 %v745, %v744
    %v753 = vpack.c.b16 %v747, %v746
    %v754 = vpack.c.b16 %v749, %v748
    %v755 = vpack.c.b16 %v751, %v750
    %vm760 = vcmask 523264
    %v762 = vsel %vm760, %v727, 0
    %764 = vmatprep.subr.bf16.mxu0 0
    %765 = vmatpush1.bf16.msra.mxu0 %v752
    %766 = vmatprep.subr.bf16.mxu0 0
    %767 = vmatpush1.bf16.msra.mxu0 %v753
    %768 = vmatprep.subr.bf16.mxu0 0
    %769 = vmatpush1.bf16.msra.mxu0 %v754
    %770 = vmatprep.subr.bf16.mxu0 0
    %771 = vmatpush1.bf16.msra.mxu0 %v755
    %772 = vmatprep.subr.bf16.mxu0 0
    %773 = vmatpush1.bf16.msra.mxu0 0
    %774 = vmatprep.subr.bf16.mxu0 0
    %775 = vmatpush1.bf16.msra.mxu0 0
    %776 = vmatprep.subr.bf16.mxu0 0
    %777 = vmatpush1.bf16.msra.mxu0 0
    %778 = vmatprep.subr.bf16.mxu0 0
    %779 = vmatpush1.bf16.msra.mxu0 0
    %780 = vmatprep.subr.bf16.mxu0 0
    %781 = vmatpush1.bf16.msra.mxu0 0
    %782 = vmatprep.subr.bf16.mxu0 0
    %783 = vmatpush1.bf16.msra.mxu0 0
    %784 = vmatprep.subr.bf16.mxu0 0
    %785 = vmatpush1.bf16.msra.mxu0 0
    %786 = vmatprep.subr.bf16.mxu0 0
    %787 = vmatpush1.bf16.msra.mxu0 0
    %788 = vmatprep.subr.bf16.mxu0 0
    %789 = vmatpush1.bf16.msra.mxu0 0
    %790 = vmatprep.subr.bf16.mxu0 0
    %791 = vmatpush1.bf16.msra.mxu0 0
    %792 = vmatprep.subr.bf16.mxu0 0
    %793 = vmatpush1.bf16.msra.mxu0 0
    %794 = vmatprep.subr.bf16.mxu0 0
    %795 = vmatpush1.bf16.msra.mxu0 0
    %796 = vmatprep.mubr.bf16.mxu0 0
    %797 = vmatmul.mubr.bf16.gmra.mrb[0].mxu0 %v762
    %v798 = vpop.f32.mrb[0].mxu0
    %v799 = vadd.f32 %v734, %v798
    %v800 = vpop.f32.mrb[0].mxu0
    %v801 = vpop.f32.mrb[0].mxu0
    %v802 = vpop.f32.mrb[0].mxu0
    %803 = vdwg.mxu0
    %v804 = vxor.u32 %v799, 2147483648
    %v805 = vmul.f32 %v804, 1.442695
    %v806 = vpow.pop %v805
    %v807 = vadd.f32 %v806, 1.0
    %v808 = vrcp.pop %v807
    %v809 = vmul.f32 1.0, %v808
    %811 = vrot.lane.b32.xlu0 %v799, 32
    %v812 = vpop.permute.xlu0 %811
    %v814 = vmul.f32 %v809, %v812
    %816 = vrot.lane.b32.xlu0 %v814, 64
    %v817 = vpop.permute.xlu0 %816
    %v819 = vadd.f32 %v799, %v817
    %v820 = vtanh.pop %v819
    %v821 = vsub.f32 1.0, %v809
    %823 = vrot.lane.b32.xlu0 %v820, 96
    %v824 = vpop.permute.xlu0 %823
    %v826 = vmul.f32 %v821, %v824
    %v827 = vmul.f32 %v809, %v715
    %v828 = vadd.f32 %v826, %v827
    %s829 = scalar_lea.vmem [#allocation7], 288
    %v830 = vld [vmem:[%s829] sm:$0xf]
    %v831 = vld [vmem:[%s829 + $0x4] sm:$0xf]
    %v832 = vld [vmem:[%s829 + $0x8] sm:$0xf]
    %v833 = vld [vmem:[%s829 + $0xc] sm:$0xf]
    %v834 = vpack.c.bf16 %v828, %v828
    %836 = vrot.lane.b32.xlu0 %v834, 96
    %v837 = vpop.permute.xlu0 %836
    %v842 = vunpack.c.l.b16 %v830
    %v843 = vunpack.c.l.b16 %v831
    %v844 = vunpack.c.l.b16 %v832
    %v845 = vunpack.c.l.b16 %v833
    %v846 = vpack.c.b16 %v843, %v842
    %v847 = vpack.c.b16 %v845, %v844
    %851 = vrot.lane.b32.xlu0 %v159, 96
    %v852 = vpop.permute.xlu0 %851
    %v855 = vsel %vm191, %v837, 0
    %857 = vmatprep.subr.bf16.mxu0 0
    %858 = vmatpush1.bf16.msra.mxu0 %v846
    %859 = vmatprep.subr.bf16.mxu0 0
    %860 = vmatpush1.bf16.msra.mxu0 %v847
    %861 = vmatprep.subr.bf16.mxu0 0
    %862 = vmatpush1.bf16.msra.mxu0 0
    %863 = vmatprep.subr.bf16.mxu0 0
    %864 = vmatpush1.bf16.msra.mxu0 0
    %865 = vmatprep.subr.bf16.mxu0 0
    %866 = vmatpush1.bf16.msra.mxu0 0
    %867 = vmatprep.subr.bf16.mxu0 0
    %868 = vmatpush1.bf16.msra.mxu0 0
    %869 = vmatprep.subr.bf16.mxu0 0
    %870 = vmatpush1.bf16.msra.mxu0 0
    %871 = vmatprep.subr.bf16.mxu0 0
    %872 = vmatpush1.bf16.msra.mxu0 0
    %873 = vmatprep.subr.bf16.mxu0 0
    %874 = vmatpush1.bf16.msra.mxu0 0
    %875 = vmatprep.subr.bf16.mxu0 0
    %876 = vmatpush1.bf16.msra.mxu0 0
    %877 = vmatprep.subr.bf16.mxu0 0
    %878 = vmatpush1.bf16.msra.mxu0 0
    %879 = vmatprep.subr.bf16.mxu0 0
    %880 = vmatpush1.bf16.msra.mxu0 0
    %881 = vmatprep.subr.bf16.mxu0 0
    %882 = vmatpush1.bf16.msra.mxu0 0
    %883 = vmatprep.subr.bf16.mxu0 0
    %884 = vmatpush1.bf16.msra.mxu0 0
    %885 = vmatprep.subr.bf16.mxu0 0
    %886 = vmatpush1.bf16.msra.mxu0 0
    %887 = vmatprep.subr.bf16.mxu0 0
    %888 = vmatpush1.bf16.msra.mxu0 0
    %889 = vmatprep.mubr.bf16.mxu0 0
    %890 = vmatmul.mubr.bf16.gmra.mrb[0].mxu0 %v855
    %v891 = vpop.f32.mrb[0].mxu0
    %v892 = vadd.f32 %v852, %v891
    %v893 = vpop.f32.mrb[0].mxu0
    %v894 = vpop.f32.mrb[0].mxu0
    %v895 = vpop.f32.mrb[0].mxu0
    %896 = vdwg.mxu0
    %s897 = scalar_lea.vmem [#allocation9], 14
    %v898 = vld [vmem:[%s897] sm:$0x1]
    %v900 = vlaneseq
    %v901 = vshrl.u32 %v900, 7
    %v902 = vsub.s32 0, %v901
    %v903 = vrot.slane %v898, %v902
    %v905 = vadd.f32 %v892, %v903
    %v906 = vmax.f32 %v905, 0.0
    %s907 = scalar_lea.vmem [#allocation7], 324
    %v908 = vld [vmem:[%s907] sm:$0xf]
    %v909 = vld [vmem:[%s907 + $0x4] sm:$0xf]
    %v910 = vld [vmem:[%s907 + $0x8] sm:$0xf]
    %v911 = vld [vmem:[%s907 + $0xc] sm:$0xf]
    %v912 = vld [vmem:[%s907 + $0x10] sm:$0xf]
    %v913 = vld [vmem:[%s907 + $0x14] sm:$0xf]
    %v914 = vld [vmem:[%s907 + $0x18] sm:$0xf]
    %v915 = vld [vmem:[%s907 + $0x1c] sm:$0xf]
    %v916 = vpack.c.bf16 %v906, %v906
    %s917 = scalar_lea.vmem [#allocation9], 15
    %v918 = vld [vmem:[%s917] sm:$0x1]
    %v920 = vlaneseq
    %v921 = vshrl.u32 %v920, 7
    %v922 = vsub.s32 0, %v921
    %v923 = vrot.slane %v918, %v922
    %v933 = vunpack.c.l.b16 %v908
    %v934 = vunpack.c.l.b16 %v909
    %v935 = vunpack.c.l.b16 %v910
    %v936 = vunpack.c.l.b16 %v911
    %v937 = vunpack.c.l.b16 %v912
    %v938 = vunpack.c.l.b16 %v913
    %v939 = vunpack.c.l.b16 %v914
    %v940 = vunpack.c.l.b16 %v915
    %v941 = vpack.c.b16 %v934, %v933
    %v942 = vpack.c.b16 %v936, %v935
    %v943 = vpack.c.b16 %v938, %v937
    %v944 = vpack.c.b16 %v940, %v939
    %v950 = vsel %vm760, %v916, 0
    %952 = vmatprep.subr.bf16.mxu0 0
    %953 = vmatpush1.bf16.msra.mxu0 %v941
    %954 = vmatprep.subr.bf16.mxu0 0
    %955 = vmatpush1.bf16.msra.mxu0 %v942
    %956 = vmatprep.subr.bf16.mxu0 0
    %957 = vmatpush1.bf16.msra.mxu0 %v943
    %958 = vmatprep.subr.bf16.mxu0 0
    %959 = vmatpush1.bf16.msra.mxu0 %v944
    %960 = vmatprep.subr.bf16.mxu0 0
    %961 = vmatpush1.bf16.msra.mxu0 0
    %962 = vmatprep.subr.bf16.mxu0 0
    %963 = vmatpush1.bf16.msra.mxu0 0
    %964 = vmatprep.subr.bf16.mxu0 0
    %965 = vmatpush1.bf16.msra.mxu0 0
    %966 = vmatprep.subr.bf16.mxu0 0
    %967 = vmatpush1.bf16.msra.mxu0 0
    %968 = vmatprep.subr.bf16.mxu0 0
    %969 = vmatpush1.bf16.msra.mxu0 0
    %970 = vmatprep.subr.bf16.mxu0 0
    %971 = vmatpush1.bf16.msra.mxu0 0
    %972 = vmatprep.subr.bf16.mxu0 0
    %973 = vmatpush1.bf16.msra.mxu0 0
    %974 = vmatprep.subr.bf16.mxu0 0
    %975 = vmatpush1.bf16.msra.mxu0 0
    %976 = vmatprep.subr.bf16.mxu0 0
    %977 = vmatpush1.bf16.msra.mxu0 0
    %978 = vmatprep.subr.bf16.mxu0 0
    %979 = vmatpush1.bf16.msra.mxu0 0
    %980 = vmatprep.subr.bf16.mxu0 0
    %981 = vmatpush1.bf16.msra.mxu0 0
    %982 = vmatprep.subr.bf16.mxu0 0
    %983 = vmatpush1.bf16.msra.mxu0 0
    %984 = vmatprep.mubr.bf16.mxu0 0
    %985 = vmatmul.mubr.bf16.gmra.mrb[0].mxu0 %v950
    %v986 = vpop.f32.mrb[0].mxu0
    %v987 = vadd.f32 %v923, %v986
    %v988 = vpop.f32.mrb[0].mxu0
    %v989 = vpop.f32.mrb[0].mxu0
    %v990 = vpop.f32.mrb[0].mxu0
    %991 = vdwg.mxu0
    %v992 = vlaneseq
    %v993 = vand.u32 %v992, 127
    %vm994 = vcmask 58368
    %v995 = vsel %vm994, %v987, -inf
    %996 = vmax.xlane.f32.xlu0 %v995
    %v997 = vpop.xlane.xlu0 %996
    %vm998 = vcmp.ge.f32.partialorder %v987, %v997
    %v999 = vsel %vm998, %v993, 8
    %v1000 = vsel %vm994, %v999, 2147483647
    %v1001 = vand.u32 %v1000, 65535
    %v1002 = vshra.s32 %v1000, 16
    %v1003 = vcvt.s32.f32 %v1001
    %v1004 = vcvt.s32.f32 %v1002
    %1005 = vmin.xlane.f32.xlu0 %v1004
    %v1006 = vpop.xlane.xlu0 %1005
    %vm1007 = vcmp.eq.f32.partialorder %v1004, %v1006
    %v1008 = vsel %vm1007, %v1003, inf
    %1009 = vmin.xlane.f32.xlu0 %v1008
    %v1010 = vpop.xlane.xlu0 %1009
    %v1011 = vcvt.f32.s32 %v1010
    %v1012 = vcvt.f32.s32 %v1006
    %v1013 = vshll.u32 %v1012, 16
    %v1014 = vadd.s32 %v1013, %v1011
    %vm1015 = vcmp.eq.s32.totalorder %v993, %v1014
    %v1016 = vsel %vm1015, 1.0, 0.0
    %vm1017 = vcmask 123968
    %v1018 = vsel %vm1017, %v987, -inf
    %1019 = vmax.xlane.f32.xlu0 %v1018
    %v1020 = vpop.xlane.xlu0 %1019
    %vm1021 = vcmp.ge.f32.partialorder %v987, %v1020
    %1022 = vrot.lane.b32.xlu0 %v993, 8
    %v1023 = vpop.permute.xlu0 %1022
    %v1024 = vsel %vm1021, %v1023, 8
    %v1025 = vsel %vm1017, %v1024, 2147483647
    %v1026 = vand.u32 %v1025, 65535
    %v1027 = vshra.s32 %v1025, 16
    %v1028 = vcvt.s32.f32 %v1026
    %v1029 = vcvt.s32.f32 %v1027
    %1030 = vmin.xlane.f32.xlu0 %v1029
    %v1031 = vpop.xlane.xlu0 %1030
    %vm1032 = vcmp.eq.f32.partialorder %v1029, %v1031
    %v1033 = vsel %vm1032, %v1028, inf
    %1034 = vmin.xlane.f32.xlu0 %v1033
    %v1035 = vpop.xlane.xlu0 %1034
    %v1036 = vcvt.f32.s32 %v1035
    %v1037 = vcvt.f32.s32 %v1031
    %v1038 = vshll.u32 %v1037, 16
    %v1039 = vadd.s32 %v1038, %v1036
    %v1040 = vadd.s32 %v1039, 8
    %vm1041 = vcmp.eq.s32.totalorder %v993, %v1040
    %v1042 = vsel %vm1041, 1.0, %v1016
    %vm1043 = vcmask 189568
    %v1044 = vsel %vm1043, %v987, -inf
    %1045 = vmax.xlane.f32.xlu0 %v1044
    %v1046 = vpop.xlane.xlu0 %1045
    %vm1047 = vcmp.ge.f32.partialorder %v987, %v1046
    %1048 = vrot.lane.b32.xlu0 %v993, 16
    %v1049 = vpop.permute.xlu0 %1048
    %v1050 = vsel %vm1047, %v1049, 8
    %v1051 = vsel %vm1043, %v1050, 2147483647
    %v1052 = vand.u32 %v1051, 65535
    %v1053 = vshra.s32 %v1051, 16
    %v1054 = vcvt.s32.f32 %v1052
    %v1055 = vcvt.s32.f32 %v1053
    %1056 = vmin.xlane.f32.xlu0 %v1055
    %v1057 = vpop.xlane.xlu0 %1056
    %vm1058 = vcmp.eq.f32.partialorder %v1055, %v1057
    %v1059 = vsel %vm1058, %v1054, inf
    %1060 = vmin.xlane.f32.xlu0 %v1059
    %v1061 = vpop.xlane.xlu0 %1060
    %v1062 = vcvt.f32.s32 %v1061
    %v1063 = vcvt.f32.s32 %v1057
    %v1064 = vshll.u32 %v1063, 16
    %v1065 = vadd.s32 %v1064, %v1062
    %v1066 = vadd.s32 %v1065, 16
    %vm1067 = vcmp.eq.s32.totalorder %v993, %v1066
    %v1068 = vsel %vm1067, 1.0, %v1042
    %vm1069 = vcmask 255168
    %v1070 = vsel %vm1069, %v987, -inf
    %1071 = vmax.xlane.f32.xlu0 %v1070
    %v1072 = vpop.xlane.xlu0 %1071
    %vm1073 = vcmp.ge.f32.partialorder %v987, %v1072
    %1074 = vrot.lane.b32.xlu0 %v993, 24
    %v1075 = vpop.permute.xlu0 %1074
    %v1076 = vsel %vm1073, %v1075, 8
    %v1077 = vsel %vm1069, %v1076, 2147483647
    %v1078 = vand.u32 %v1077, 65535
    %v1079 = vshra.s32 %v1077, 16
    %v1080 = vcvt.s32.f32 %v1078
    %v1081 = vcvt.s32.f32 %v1079
    %1082 = vmin.xlane.f32.xlu0 %v1081
    %v1083 = vpop.xlane.xlu0 %1082
    %vm1084 = vcmp.eq.f32.partialorder %v1081, %v1083
    %v1085 = vsel %vm1084, %v1080, inf
    %1086 = vmin.xlane.f32.xlu0 %v1085
    %v1087 = vpop.xlane.xlu0 %1086
    %v1088 = vcvt.f32.s32 %v1087
    %v1089 = vcvt.f32.s32 %v1083
    %v1090 = vshll.u32 %v1089, 16
    %v1091 = vadd.s32 %v1090, %v1088
    %v1092 = vadd.s32 %v1091, 24
    %vm1093 = vcmp.eq.s32.totalorder %v993, %v1092
    %v1094 = vsel %vm1093, 1.0, %v1068
    %vm1095 = vcmask 320768
    %v1096 = vsel %vm1095, %v987, -inf
    %1097 = vmax.xlane.f32.xlu0 %v1096
    %v1098 = vpop.xlane.xlu0 %1097
    %vm1099 = vcmp.ge.f32.partialorder %v987, %v1098
    %1100 = vrot.lane.b32.xlu0 %v993, 32
    %v1101 = vpop.permute.xlu0 %1100
    %v1102 = vsel %vm1099, %v1101, 8
    %v1103 = vsel %vm1095, %v1102, 2147483647
    %v1104 = vand.u32 %v1103, 65535
    %v1105 = vshra.s32 %v1103, 16
    %v1106 = vcvt.s32.f32 %v1104
    %v1107 = vcvt.s32.f32 %v1105
    %1108 = vmin.xlane.f32.xlu0 %v1107
    %v1109 = vpop.xlane.xlu0 %1108
    %vm1110 = vcmp.eq.f32.partialorder %v1107, %v1109
    %v1111 = vsel %vm1110, %v1106, inf
    %1112 = vmin.xlane.f32.xlu0 %v1111
    %v1113 = vpop.xlane.xlu0 %1112
    %v1114 = vcvt.f32.s32 %v1113
    %v1115 = vcvt.f32.s32 %v1109
    %v1116 = vshll.u32 %v1115, 16
    %v1117 = vadd.s32 %v1116, %v1114
    %v1118 = vadd.s32 %v1117, 32
    %vm1119 = vcmp.eq.s32.totalorder %v993, %v1118
    %v1120 = vsel %vm1119, 1.0, %v1094
    %vm1121 = vcmask 386368
    %v1122 = vsel %vm1121, %v987, -inf
    %1123 = vmax.xlane.f32.xlu0 %v1122
    %v1124 = vpop.xlane.xlu0 %1123
    %vm1125 = vcmp.ge.f32.partialorder %v987, %v1124
    %1126 = vrot.lane.b32.xlu0 %v993, 40
    %v1127 = vpop.permute.xlu0 %1126
    %v1128 = vsel %vm1125, %v1127, 8
    %v1129 = vsel %vm1121, %v1128, 2147483647
    %v1130 = vand.u32 %v1129, 65535
    %v1131 = vshra.s32 %v1129, 16
    %v1132 = vcvt.s32.f32 %v1130
    %v1133 = vcvt.s32.f32 %v1131
    %1134 = vmin.xlane.f32.xlu0 %v1133
    %v1135 = vpop.xlane.xlu0 %1134
    %vm1136 = vcmp.eq.f32.partialorder %v1133, %v1135
    %v1137 = vsel %vm1136, %v1132, inf
    %1138 = vmin.xlane.f32.xlu0 %v1137
    %v1139 = vpop.xlane.xlu0 %1138
    %v1140 = vcvt.f32.s32 %v1139
    %v1141 = vcvt.f32.s32 %v1135
    %v1142 = vshll.u32 %v1141, 16
    %v1143 = vadd.s32 %v1142, %v1140
    %v1144 = vadd.s32 %v1143, 40
    %vm1145 = vcmp.eq.s32.totalorder %v993, %v1144
    %v1146 = vsel %vm1145, 1.0, %v1120
    %vm1147 = vcmask 451968
    %v1148 = vsel %vm1147, %v987, -inf
    %1149 = vmax.xlane.f32.xlu0 %v1148
    %v1150 = vpop.xlane.xlu0 %1149
    %vm1151 = vcmp.ge.f32.partialorder %v987, %v1150
    %1152 = vrot.lane.b32.xlu0 %v993, 48
    %v1153 = vpop.permute.xlu0 %1152
    %v1154 = vsel %vm1151, %v1153, 8
    %v1155 = vsel %vm1147, %v1154, 2147483647
    %v1156 = vand.u32 %v1155, 65535
    %v1157 = vshra.s32 %v1155, 16
    %v1158 = vcvt.s32.f32 %v1156
    %v1159 = vcvt.s32.f32 %v1157
    %1160 = vmin.xlane.f32.xlu0 %v1159
    %v1161 = vpop.xlane.xlu0 %1160
    %vm1162 = vcmp.eq.f32.partialorder %v1159, %v1161
    %v1163 = vsel %vm1162, %v1158, inf
    %1164 = vmin.xlane.f32.xlu0 %v1163
    %v1165 = vpop.xlane.xlu0 %1164
    %v1166 = vcvt.f32.s32 %v1165
    %v1167 = vcvt.f32.s32 %v1161
    %v1168 = vshll.u32 %v1167, 16
    %v1169 = vadd.s32 %v1168, %v1166
    %v1170 = vadd.s32 %v1169, 48
    %vm1171 = vcmp.eq.s32.totalorder %v993, %v1170
    %v1172 = vsel %vm1171, 1.0, %v1146
    %vm1173 = vcmask 517568
    %v1174 = vsel %vm1173, %v987, -inf
    %1175 = vmax.xlane.f32.xlu0 %v1174
    %v1176 = vpop.xlane.xlu0 %1175
    %vm1177 = vcmp.ge.f32.partialorder %v987, %v1176
    %1178 = vrot.lane.b32.xlu0 %v993, 56
    %v1179 = vpop.permute.xlu0 %1178
    %v1180 = vsel %vm1177, %v1179, 8
    %v1181 = vsel %vm1173, %v1180, 2147483647
    %v1182 = vand.u32 %v1181, 65535
    %v1183 = vshra.s32 %v1181, 16
    %v1184 = vcvt.s32.f32 %v1182
    %v1185 = vcvt.s32.f32 %v1183
    %1186 = vmin.xlane.f32.xlu0 %v1185
    %v1187 = vpop.xlane.xlu0 %1186
    %vm1188 = vcmp.eq.f32.partialorder %v1185, %v1187
    %v1189 = vsel %vm1188, %v1184, inf
    %1190 = vmin.xlane.f32.xlu0 %v1189
    %v1191 = vpop.xlane.xlu0 %1190
    %v1192 = vcvt.f32.s32 %v1191
    %v1193 = vcvt.f32.s32 %v1187
    %v1194 = vshll.u32 %v1193, 16
    %v1195 = vadd.s32 %v1194, %v1192
    %v1196 = vadd.s32 %v1195, 56
    %vm1197 = vcmp.eq.s32.totalorder %v993, %v1196
    %v1198 = vsel %vm1197, 1.0, %v1172
    %1200 = vrot.lane.b32.xlu0 %v1198, 96
    %v1201 = vpop.permute.xlu0 %1200
    %1203 = vst.msk [vmem:[#allocation2] sm:$0x3] %vm239, %v1201
    %1205 = vrot.lane.b32.xlu0 %v828, 96
    %v1206 = vpop.permute.xlu0 %1205
    %1208 = vst.msk [vmem:[#allocation3] sm:$0x3] %vm239, %v1206
    %1210 = vrot.lane.b32.xlu0 %v987, 32
    %v1211 = vpop.permute.xlu0 %1210
    %v1213 = vsel %vm191, %v1206, %v1211
    %vm1214 = vcmask 785408
    %v1215 = vsel %vm1214, %v1213, %v1201
    %v1217 = vcombine.low %v1215, %v1201
    %v1219 = vunpack.c.l.s4 1983009808
    %v1220 = vunpack.c.0.s8 %v1219
    %v1221 = vlaneseq
    %v1222 = vshrl.u32 %v1221, 7
    %v1223 = vsub.s32 %v1220, %v1222
    %v1224 = vrot.slane %v1217, %v1223
    %vm1226 = vcmask 1041408
    %vm1227 = vcmask 257026
    %vm1228 = vmor %vm1227, %vm1226
    %1229 = vst.msk [vmem:[#allocation10] sm:$0xf] %vm1228, %v1224
    // Predicated region
    $region38: #{tpu_custom_call.1} parent=1 // pred_check
      _
    $region39: #{tpu_custom_call.1} parent=1 // pred_check_branch
      %1231 = sbr.rel (0) target = $region41
    $region40: #{tpu_custom_call.1} parent=1 // pred_region
      %s1233 = ssub.s32 64, 64
      %1234 = vsyncadd [#allocation6], %s1233
      %s1236 = sshll.u32 [#allocation10], 4
      %s1237 = int_to_ptr.vmem [resolvable:$true] %s1236
      %1239 = dma.vmem_to_hbm [thread:$0]  %s1237, 64, %s5, [#allocation6]
    $region41: #{tpu_custom_call.1} parent=1 // pred_fallthru
      _
    // Predicated region
    $region42: #{tpu_custom_call.1} parent=1 // pred_check
      _
    $region43: #{tpu_custom_call.1} parent=1 // pred_check_branch
      %1241 = sbr.rel (0) target = $region45
    $region44: #{tpu_custom_call.1} parent=1 // pred_region
      %1242 = dma.done [#allocation6], 64
    $region45: #{tpu_custom_call.1} parent=1 // pred_fallthru
      _
    %1243 = vsyncpa [#allocation5], 1
    %1244 = vsyncpa [#allocation8], 1
    %1245 = vsyncpa [#allocation6], 1

</llo_original>
